<compile_context>
chip_gen: v6e
topology: v6e:2x2x1
jax: 0.10.0
libtpu: 0.0.40
codegen_flags: <defaults>
</compile_context>

<pallas_src>
import math
from functools import partial

import jax
import jax.numpy as jnp
from jax.experimental import pallas as pl
from jax.experimental.pallas import tpu as pltpu

N_LAYERS = 5      # [in] + [128]*4 + [128*C]  -> 5 Linear layers per MLP
HIDDEN = 128


def _round_up(x, m):
    return ((x + m - 1) // m) * m


def _gelu_exact(x):
    # PyTorch's default GELU (approximate='none'): 0.5*x*(1+erf(x/sqrt(2))).
    return 0.5 * x * (1.0 + jax.lax.erf(x * (1.0 / math.sqrt(2.0))))


def _mlp(h, w_refs, b_refs):
    for i in range(N_LAYERS):
        h = jnp.dot(h, w_refs[i][...], preferred_element_type=jnp.float32) + b_refs[i][...]
        if i < N_LAYERS - 1:
            h = _gelu_exact(h)
    return h


# ----------------------------------------------------------------------------- kernel
def _make_kernel(out_channel):
    C = out_channel

    def kernel(*refs):
        # refs: 0: x tile (B_tile, in_b_pad)        1: grid tile (N_tile, in_t_pad)
        #       2..6  branch W    7..11 branch b    12..16 trunk W    17..21 trunk b
        #       22: out tile (C, B_tile, N_tile)    23: h_scratch (B_tile, 128*C)
        x_ref, g_ref = refs[0], refs[1]
        bw = refs[2:2 + N_LAYERS]
        bb = refs[2 + N_LAYERS:2 + 2 * N_LAYERS]
        tw = refs[2 + 2 * N_LAYERS:2 + 3 * N_LAYERS]
        tb = refs[2 + 3 * N_LAYERS:2 + 4 * N_LAYERS]
        out_ref = refs[2 + 4 * N_LAYERS]
        h_scratch = refs[3 + 4 * N_LAYERS]

        # Branch MLP: once per B tile, cached in VMEM scratch across the (inner, sequential) N axis.
        @pl.when(pl.program_id(1) == 0)
        def _():
            h_scratch[...] = _mlp(x_ref[...], bw, bb)

        # Trunk MLP + the extra trailing activation of the PyTorch module.
        g = _gelu_exact(_mlp(g_ref[...], tw, tb))
        h = h_scratch[...]

        # einsum('bci,nci->cbn'): one MXU dot per channel over 128-aligned lane slices
        # (static slices -> no relayout), each writing a full (B_tile, N_tile) tile.
        for c in range(C):
            lo, hi = c * HIDDEN, (c + 1) * HIDDEN
            out_ref[c] = jax.lax.dot_general(
                h[:, lo:hi], g[:, lo:hi],
                dimension_numbers=(((1,), (1,)), ((), ())),
                preferred_element_type=jnp.float32)

    return kernel


# ----------------------------------------------------------------------------- params
def _glorot_normal(key, fan_in, fan_out):
    std = math.sqrt(2.0 / (fan_in + fan_out))
    return (std * jax.random.normal(key, (fan_in, fan_out))).astype(jnp.float32)


def init_params(key, size, query_dim, in_channel_branch=1, out_channel=1):
    """Raw parameters in the module's semantics: weights transposed to (fan_in, fan_out),
    1-D biases, plus the final per-channel bias b of shape (out_channel,)."""
    in_b = in_channel_branch * size
    in_t = query_dim
    out_dim = HIDDEN * out_channel
    hidden = [HIDDEN] * 4
    b_sizes = [in_b] + hidden + [out_dim]
    t_sizes = [in_t] + hidden + [out_dim]
    keys = jax.random.split(key, 2 * N_LAYERS)
    bw = tuple(_glorot_normal(keys[i], b_sizes[i], b_sizes[i + 1]) for i in range(N_LAYERS))
    bb = tuple(jnp.zeros((b_sizes[i + 1],), jnp.float32) for i in range(N_LAYERS))
    tw = tuple(_glorot_normal(keys[N_LAYERS + i], t_sizes[i], t_sizes[i + 1]) for i in range(N_LAYERS))
    tb = tuple(jnp.zeros((t_sizes[i + 1],), jnp.float32) for i in range(N_LAYERS))
    bparam = jnp.zeros((out_channel,), jnp.float32)
    return bw, bb, tw, tb, bparam


def pack_params(params):
    """One-time packing for the kernel (do NOT redo per forward call): pad first-layer fan-in to
    a sublane multiple (8) and reshape biases to (1, width) rows."""
    bw, bb, tw, tb, bparam = params

    def pad_first(w):
        fi = w.shape[0]
        fi_pad = max(_round_up(fi, 8), 8)
        return jnp.pad(w, ((0, fi_pad - fi), (0, 0)))

    bw_p = (pad_first(bw[0]),) + tuple(bw[1:])
    tw_p = (pad_first(tw[0]),) + tuple(tw[1:])
    bb_p = tuple(v.reshape(1, -1) for v in bb)
    tb_p = tuple(v.reshape(1, -1) for v in tb)
    return bw_p, bb_p, tw_p, tb_p, bparam


# ----------------------------------------------------------------------------- forward
@partial(jax.jit, static_argnames=("query_dim", "out_channel", "b_tile", "n_tile"))
def deeponet1d_forward(x, grid, packed_params, query_dim, out_channel,
                       b_tile=256, n_tile=512):
    bw, bb, tw, tb, bparam = packed_params
    C = out_channel
    d_out = HIDDEN * C

    B = x.shape[0]
    x2 = x.reshape(B, -1).astype(jnp.float32)                 # (B, in_channel_branch*size)
    g2 = grid[0].reshape(-1, query_dim).astype(jnp.float32)   # (N, query_dim): grid[0] only
    N = g2.shape[0]

    in_b_pad = bw[0].shape[0]
    in_t_pad = tw[0].shape[0]

    # Tiles: B tiles sublane(8)-aligned, N tiles lane(128)-aligned (unmasked output stores),
    # clamped to the padded problem size so tiny problems stay a (1, 1) grid.
    bt = min(b_tile, _round_up(B, 8))
    nt = min(n_tile, _round_up(N, 128))
    B_pad = _round_up(B, bt)
    N_pad = _round_up(N, nt)

    x_pad = jnp.pad(x2, ((0, B_pad - B), (0, in_b_pad - x2.shape[1])))
    g_pad = jnp.pad(g2, ((0, N_pad - N), (0, in_t_pad - g2.shape[1])))

    def resident(a):
        # Whole array as one block, constant block index -> DMA'd once, stays resident in VMEM.
        return pl.BlockSpec(a.shape, lambda b, n: (0, 0))

    weights = (*bw, *bb, *tw, *tb)

    out = pl.pallas_call(
        _make_kernel(C),
        out_shape=jax.ShapeDtypeStruct((C, B_pad, N_pad), jnp.float32),
        grid_spec=pltpu.PrefetchScalarGridSpec(
            num_scalar_prefetch=0,
            grid=(B_pad // bt, N_pad // nt),
            in_specs=[
                pl.BlockSpec((bt, in_b_pad), lambda b, n: (b, 0)),
                pl.BlockSpec((nt, in_t_pad), lambda b, n: (n, 0)),
            ] + [resident(a) for a in weights],
            out_specs=pl.BlockSpec((C, bt, nt), lambda b, n: (0, b, n)),
            scratch_shapes=[pltpu.VMEM((bt, d_out), jnp.float32)],
        ),
        compiler_params=pltpu.CompilerParams(
            # B tiles run in parallel across TensorCores (2 on v7x); the N axis must stay
            # sequential ("arbitrary") because h_scratch is carried across it.
            dimension_semantics=("parallel", "arbitrary"),
            vmem_limit_bytes=48 * 1024 * 1024,
        ),
    )(x_pad, g_pad, *weights)

    # (C, B_pad, N_pad) -> (B, N, C); fold the per-channel bias into the (fused) epilogue.
    # NOTE: for C == 1 the transpose is a free reshape; for C > 1, downstream consumers that can
    # take the (C, B, N) layout directly should do so to avoid the extra HBM round trip.
    return jnp.transpose(out, (1, 2, 0))[:B, :N, :] + bparam


# ----------------------------------------------------------------------------- pure-JAX reference
def reference_forward(x, grid, params, query_dim, out_channel):
    bw, bb, tw, tb, bparam = params
    B = x.shape[0]
    h = x.reshape(B, -1).astype(jnp.float32)
    for i in range(N_LAYERS):
        h = h @ bw[i] + bb[i]
        if i < N_LAYERS - 1:
            h = _gelu_exact(h)
    g = grid[0].reshape(-1, query_dim).astype(jnp.float32)
    for i in range(N_LAYERS):
        g = g @ tw[i] + tb[i]
        if i < N_LAYERS - 1:
            g = _gelu_exact(g)
    g = _gelu_exact(g)
    N = g.shape[0]
    hb = h.reshape(B, out_channel, -1)
    gt = g.reshape(N, out_channel, -1)
    return jnp.einsum('bci,nci->bnc', hb, gt) + bparam


def _randomize_biases(key, params, scale=0.05):
    """The torch module initializes all biases to zero; randomize them here so the test
    actually exercises every bias-add path."""
    bw, bb, tw, tb, bparam = params
    ks = jax.random.split(key, 2 * N_LAYERS + 1)
    bb = tuple(scale * jax.random.normal(ks[i], v.shape, jnp.float32) for i, v in enumerate(bb))
    tb = tuple(scale * jax.random.normal(ks[N_LAYERS + i], v.shape, jnp.float32)
               for i, v in enumerate(tb))
    bparam = scale * jax.random.normal(ks[-1], bparam.shape, jnp.float32)
    return bw, bb, tw, tb, bparam


if __name__ == "__main__":
    key = jax.random.PRNGKey(0)

    configs = [
        dict(size=16, query_dim=1, in_channel_branch=1, out_channel=1, B=6, N=20),
        dict(size=16, query_dim=2, in_channel_branch=2, out_channel=2, B=8, N=16),
    ]
    for cfg in configs:
        key, kp, kb, kx, kg = jax.random.split(key, 5)
        params = init_params(kp, cfg["size"], cfg["query_dim"],
                             cfg["in_channel_branch"], cfg["out_channel"])
        params = _randomize_biases(kb, params)
        packed = pack_params(params)   # one-time packing, reused across forward calls

        x = jax.random.normal(kx, (cfg["B"], cfg["in_channel_branch"], cfg["size"]),
                              dtype=jnp.float32)
        grid = jax.random.uniform(kg, (cfg["B"], cfg["N"], cfg["query_dim"]),
                                  dtype=jnp.float32)

        out = deeponet1d_forward(x, grid, packed,
                                 query_dim=cfg["query_dim"],
                                 out_channel=cfg["out_channel"])
        out = jax.block_until_ready(out)
        assert out.shape == (cfg["B"], cfg["N"], cfg["out_channel"]), out.shape

        ref = reference_forward(x, grid, params, cfg["query_dim"], cfg["out_channel"])
        err = float(jnp.max(jnp.abs(out - ref)))
        assert jnp.allclose(out, ref, rtol=2e-3, atol=2e-3), (cfg, err)

    print("KERNEL_OK")
</pallas_src>

<mosaic_0001>
module attributes {stable_mosaic.version = 11 : i64} {
  func.func @kernel(%arg0: i32, %arg1: i32, %arg2: memref<8x16xf32, #tpu.memory_space<vmem>>, %arg3: memref<128x8xf32, #tpu.memory_space<vmem>>, %arg4: memref<16x128xf32, #tpu.memory_space<vmem>>, %arg5: memref<128x128xf32, #tpu.memory_space<vmem>>, %arg6: memref<128x128xf32, #tpu.memory_space<vmem>>, %arg7: memref<128x128xf32, #tpu.memory_space<vmem>>, %arg8: memref<128x128xf32, #tpu.memory_space<vmem>>, %arg9: memref<1x128xf32, #tpu.memory_space<vmem>>, %arg10: memref<1x128xf32, #tpu.memory_space<vmem>>, %arg11: memref<1x128xf32, #tpu.memory_space<vmem>>, %arg12: memref<1x128xf32, #tpu.memory_space<vmem>>, %arg13: memref<1x128xf32, #tpu.memory_space<vmem>>, %arg14: memref<8x128xf32, #tpu.memory_space<vmem>>, %arg15: memref<128x128xf32, #tpu.memory_space<vmem>>, %arg16: memref<128x128xf32, #tpu.memory_space<vmem>>, %arg17: memref<128x128xf32, #tpu.memory_space<vmem>>, %arg18: memref<128x128xf32, #tpu.memory_space<vmem>>, %arg19: memref<1x128xf32, #tpu.memory_space<vmem>>, %arg20: memref<1x128xf32, #tpu.memory_space<vmem>>, %arg21: memref<1x128xf32, #tpu.memory_space<vmem>>, %arg22: memref<1x128xf32, #tpu.memory_space<vmem>>, %arg23: memref<1x128xf32, #tpu.memory_space<vmem>>, %arg24: memref<1x8x128xf32, #tpu.memory_space<vmem>>, %arg25: memref<8x128xf32, #tpu.memory_space<vmem>>) attributes {dimension_semantics = [#tpu.dimension_semantics<parallel>, #tpu.dimension_semantics<arbitrary>], iteration_bounds = array<i64: 1, 1>, scalar_prefetch = 0 : i64, scratch_operands = 1 : i64, tpu.core_type = #tpu.core_type<tc>, window_params = [{transform_indices = @transform_0, window_bounds = array<i64: 8, 16>}, {transform_indices = @transform_1, window_bounds = array<i64: 128, 8>}, {pipeline_mode = #tpu.pipeline_mode<synchronous>, transform_indices = @transform_2, window_bounds = array<i64: 16, 128>}, {pipeline_mode = #tpu.pipeline_mode<synchronous>, transform_indices = @transform_3, window_bounds = array<i64: 128, 128>}, {pipeline_mode = #tpu.pipeline_mode<synchronous>, transform_indices = @transform_4, window_bounds = array<i64: 128, 128>}, {pipeline_mode = #tpu.pipeline_mode<synchronous>, transform_indices = @transform_5, window_bounds = array<i64: 128, 128>}, {pipeline_mode = #tpu.pipeline_mode<synchronous>, transform_indices = @transform_6, window_bounds = array<i64: 128, 128>}, {pipeline_mode = #tpu.pipeline_mode<synchronous>, transform_indices = @transform_7, window_bounds = array<i64: 1, 128>}, {pipeline_mode = #tpu.pipeline_mode<synchronous>, transform_indices = @transform_8, window_bounds = array<i64: 1, 128>}, {pipeline_mode = #tpu.pipeline_mode<synchronous>, transform_indices = @transform_9, window_bounds = array<i64: 1, 128>}, {pipeline_mode = #tpu.pipeline_mode<synchronous>, transform_indices = @transform_10, window_bounds = array<i64: 1, 128>}, {pipeline_mode = #tpu.pipeline_mode<synchronous>, transform_indices = @transform_11, window_bounds = array<i64: 1, 128>}, {pipeline_mode = #tpu.pipeline_mode<synchronous>, transform_indices = @transform_12, window_bounds = array<i64: 8, 128>}, {pipeline_mode = #tpu.pipeline_mode<synchronous>, transform_indices = @transform_13, window_bounds = array<i64: 128, 128>}, {pipeline_mode = #tpu.pipeline_mode<synchronous>, transform_indices = @transform_14, window_bounds = array<i64: 128, 128>}, {pipeline_mode = #tpu.pipeline_mode<synchronous>, transform_indices = @transform_15, window_bounds = array<i64: 128, 128>}, {pipeline_mode = #tpu.pipeline_mode<synchronous>, transform_indices = @transform_16, window_bounds = array<i64: 128, 128>}, {pipeline_mode = #tpu.pipeline_mode<synchronous>, transform_indices = @transform_17, window_bounds = array<i64: 1, 128>}, {pipeline_mode = #tpu.pipeline_mode<synchronous>, transform_indices = @transform_18, window_bounds = array<i64: 1, 128>}, {pipeline_mode = #tpu.pipeline_mode<synchronous>, transform_indices = @transform_19, window_bounds = array<i64: 1, 128>}, {pipeline_mode = #tpu.pipeline_mode<synchronous>, transform_indices = @transform_20, window_bounds = array<i64: 1, 128>}, {pipeline_mode = #tpu.pipeline_mode<synchronous>, transform_indices = @transform_21, window_bounds = array<i64: 1, 128>}, {transform_indices = @transform_22, window_bounds = array<i64: 1, 8, 128>}]} {
    %c0_i32 = arith.constant 0 : i32
    %0 = arith.cmpi eq, %arg1, %c0_i32 : i32
    %1 = arith.extui %0 : i1 to i32
    %c0_i32_0 = arith.constant 0 : i32
    %2 = arith.cmpi ne, %1, %c0_i32_0 : i32
    scf.if %2 {
      %c0_47 = arith.constant 0 : index
      %c0_48 = arith.constant 0 : index
      %74 = vector.load %arg2[%c0_47, %c0_48] : memref<8x16xf32, #tpu.memory_space<vmem>>, vector<8x16xf32>
      %c0_49 = arith.constant 0 : index
      %c0_50 = arith.constant 0 : index
      %75 = vector.load %arg4[%c0_49, %c0_50] : memref<16x128xf32, #tpu.memory_space<vmem>>, vector<16x128xf32>
      %cst_51 = arith.constant dense<0.000000e+00> : vector<8x128xf32>
      %76 = tpu.matmul %74, %75, %cst_51 {dimension_numbers = #tpu.dot_dimension_numbers<[1], [0], [0], [1], [0, 0, 1, 1], [], []>} : vector<8x16xf32>, vector<16x128xf32>, vector<8x128xf32> -> vector<8x128xf32>
      %c0_52 = arith.constant 0 : index
      %c0_53 = arith.constant 0 : index
      %77 = vector.load %arg9[%c0_52, %c0_53] : memref<1x128xf32, #tpu.memory_space<vmem>>, vector<1x128xf32>
      %78 = vector.broadcast %77 : vector<1x128xf32> to vector<8x128xf32>
      %79 = arith.addf %76, %78 : vector<8x128xf32>
      %cst_54 = arith.constant 5.000000e-01 : f32
      %80 = vector.broadcast %cst_54 : f32 to vector<8x128xf32>
      %81 = arith.mulf %80, %79 : vector<8x128xf32>
      %cst_55 = arith.constant 0.707106769 : f32
      %82 = vector.broadcast %cst_55 : f32 to vector<8x128xf32>
      %83 = arith.mulf %79, %82 : vector<8x128xf32>
      %84 = math.erf %83 : vector<8x128xf32>
      %cst_56 = arith.constant 1.000000e+00 : f32
      %85 = vector.broadcast %cst_56 : f32 to vector<8x128xf32>
      %86 = arith.addf %85, %84 : vector<8x128xf32>
      %87 = arith.mulf %81, %86 : vector<8x128xf32>
      %c0_57 = arith.constant 0 : index
      %c0_58 = arith.constant 0 : index
      %88 = vector.load %arg5[%c0_57, %c0_58] : memref<128x128xf32, #tpu.memory_space<vmem>>, vector<128x128xf32>
      %cst_59 = arith.constant dense<0.000000e+00> : vector<8x128xf32>
      %89 = tpu.matmul %87, %88, %cst_59 {dimension_numbers = #tpu.dot_dimension_numbers<[1], [0], [0], [1], [0, 0, 1, 1], [], []>} : vector<8x128xf32>, vector<128x128xf32>, vector<8x128xf32> -> vector<8x128xf32>
      %c0_60 = arith.constant 0 : index
      %c0_61 = arith.constant 0 : index
      %90 = vector.load %arg10[%c0_60, %c0_61] : memref<1x128xf32, #tpu.memory_space<vmem>>, vector<1x128xf32>
      %91 = vector.broadcast %90 : vector<1x128xf32> to vector<8x128xf32>
      %92 = arith.addf %89, %91 : vector<8x128xf32>
      %cst_62 = arith.constant 5.000000e-01 : f32
      %93 = vector.broadcast %cst_62 : f32 to vector<8x128xf32>
      %94 = arith.mulf %93, %92 : vector<8x128xf32>
      %cst_63 = arith.constant 0.707106769 : f32
      %95 = vector.broadcast %cst_63 : f32 to vector<8x128xf32>
      %96 = arith.mulf %92, %95 : vector<8x128xf32>
      %97 = math.erf %96 : vector<8x128xf32>
      %cst_64 = arith.constant 1.000000e+00 : f32
      %98 = vector.broadcast %cst_64 : f32 to vector<8x128xf32>
      %99 = arith.addf %98, %97 : vector<8x128xf32>
      %100 = arith.mulf %94, %99 : vector<8x128xf32>
      %c0_65 = arith.constant 0 : index
      %c0_66 = arith.constant 0 : index
      %101 = vector.load %arg6[%c0_65, %c0_66] : memref<128x128xf32, #tpu.memory_space<vmem>>, vector<128x128xf32>
      %cst_67 = arith.constant dense<0.000000e+00> : vector<8x128xf32>
      %102 = tpu.matmul %100, %101, %cst_67 {dimension_numbers = #tpu.dot_dimension_numbers<[1], [0], [0], [1], [0, 0, 1, 1], [], []>} : vector<8x128xf32>, vector<128x128xf32>, vector<8x128xf32> -> vector<8x128xf32>
      %c0_68 = arith.constant 0 : index
      %c0_69 = arith.constant 0 : index
      %103 = vector.load %arg11[%c0_68, %c0_69] : memref<1x128xf32, #tpu.memory_space<vmem>>, vector<1x128xf32>
      %104 = vector.broadcast %103 : vector<1x128xf32> to vector<8x128xf32>
      %105 = arith.addf %102, %104 : vector<8x128xf32>
      %cst_70 = arith.constant 5.000000e-01 : f32
      %106 = vector.broadcast %cst_70 : f32 to vector<8x128xf32>
      %107 = arith.mulf %106, %105 : vector<8x128xf32>
      %cst_71 = arith.constant 0.707106769 : f32
      %108 = vector.broadcast %cst_71 : f32 to vector<8x128xf32>
      %109 = arith.mulf %105, %108 : vector<8x128xf32>
      %110 = math.erf %109 : vector<8x128xf32>
      %cst_72 = arith.constant 1.000000e+00 : f32
      %111 = vector.broadcast %cst_72 : f32 to vector<8x128xf32>
      %112 = arith.addf %111, %110 : vector<8x128xf32>
      %113 = arith.mulf %107, %112 : vector<8x128xf32>
      %c0_73 = arith.constant 0 : index
      %c0_74 = arith.constant 0 : index
      %114 = vector.load %arg7[%c0_73, %c0_74] : memref<128x128xf32, #tpu.memory_space<vmem>>, vector<128x128xf32>
      %cst_75 = arith.constant dense<0.000000e+00> : vector<8x128xf32>
      %115 = tpu.matmul %113, %114, %cst_75 {dimension_numbers = #tpu.dot_dimension_numbers<[1], [0], [0], [1], [0, 0, 1, 1], [], []>} : vector<8x128xf32>, vector<128x128xf32>, vector<8x128xf32> -> vector<8x128xf32>
      %c0_76 = arith.constant 0 : index
      %c0_77 = arith.constant 0 : index
      %116 = vector.load %arg12[%c0_76, %c0_77] : memref<1x128xf32, #tpu.memory_space<vmem>>, vector<1x128xf32>
      %117 = vector.broadcast %116 : vector<1x128xf32> to vector<8x128xf32>
      %118 = arith.addf %115, %117 : vector<8x128xf32>
      %cst_78 = arith.constant 5.000000e-01 : f32
      %119 = vector.broadcast %cst_78 : f32 to vector<8x128xf32>
      %120 = arith.mulf %119, %118 : vector<8x128xf32>
      %cst_79 = arith.constant 0.707106769 : f32
      %121 = vector.broadcast %cst_79 : f32 to vector<8x128xf32>
      %122 = arith.mulf %118, %121 : vector<8x128xf32>
      %123 = math.erf %122 : vector<8x128xf32>
      %cst_80 = arith.constant 1.000000e+00 : f32
      %124 = vector.broadcast %cst_80 : f32 to vector<8x128xf32>
      %125 = arith.addf %124, %123 : vector<8x128xf32>
      %126 = arith.mulf %120, %125 : vector<8x128xf32>
      %c0_81 = arith.constant 0 : index
      %c0_82 = arith.constant 0 : index
      %127 = vector.load %arg8[%c0_81, %c0_82] : memref<128x128xf32, #tpu.memory_space<vmem>>, vector<128x128xf32>
      %cst_83 = arith.constant dense<0.000000e+00> : vector<8x128xf32>
      %128 = tpu.matmul %126, %127, %cst_83 {dimension_numbers = #tpu.dot_dimension_numbers<[1], [0], [0], [1], [0, 0, 1, 1], [], []>} : vector<8x128xf32>, vector<128x128xf32>, vector<8x128xf32> -> vector<8x128xf32>
      %c0_84 = arith.constant 0 : index
      %c0_85 = arith.constant 0 : index
      %129 = vector.load %arg13[%c0_84, %c0_85] : memref<1x128xf32, #tpu.memory_space<vmem>>, vector<1x128xf32>
      %130 = vector.broadcast %129 : vector<1x128xf32> to vector<8x128xf32>
      %131 = arith.addf %128, %130 : vector<8x128xf32>
      %c0_86 = arith.constant 0 : index
      %c0_87 = arith.constant 0 : index
      %132 = vector.load %arg25[%c0_86, %c0_87] : memref<8x128xf32, #tpu.memory_space<vmem>>, vector<8x128xf32>
      tpu.vector_store %arg25[%c0_86, %c0_87], %131 {strides = array<i32>} : memref<8x128xf32, #tpu.memory_space<vmem>>, vector<8x128xf32>,
    } else {
    }
    %c0 = arith.constant 0 : index
    %c0_1 = arith.constant 0 : index
    %3 = vector.load %arg3[%c0, %c0_1] : memref<128x8xf32, #tpu.memory_space<vmem>>, vector<128x8xf32>
    %c0_2 = arith.constant 0 : index
    %c0_3 = arith.constant 0 : index
    %4 = vector.load %arg14[%c0_2, %c0_3] : memref<8x128xf32, #tpu.memory_space<vmem>>, vector<8x128xf32>
    %cst = arith.constant dense<0.000000e+00> : vector<128x128xf32>
    %5 = tpu.matmul %3, %4, %cst {dimension_numbers = #tpu.dot_dimension_numbers<[1], [0], [0], [1], [0, 0, 1, 1], [], []>} : vector<128x8xf32>, vector<8x128xf32>, vector<128x128xf32> -> vector<128x128xf32>
    %c0_4 = arith.constant 0 : index
    %c0_5 = arith.constant 0 : index
    %6 = vector.load %arg19[%c0_4, %c0_5] : memref<1x128xf32, #tpu.memory_space<vmem>>, vector<1x128xf32>
    %7 = vector.broadcast %6 : vector<1x128xf32> to vector<128x128xf32>
    %8 = arith.addf %5, %7 : vector<128x128xf32>
    %cst_6 = arith.constant 5.000000e-01 : f32
    %9 = vector.broadcast %cst_6 : f32 to vector<128x128xf32>
    %10 = arith.mulf %9, %8 : vector<128x128xf32>
    %cst_7 = arith.constant 0.707106769 : f32
    %11 = vector.broadcast %cst_7 : f32 to vector<128x128xf32>
    %12 = arith.mulf %8, %11 : vector<128x128xf32>
    %13 = math.erf %12 : vector<128x128xf32>
    %cst_8 = arith.constant 1.000000e+00 : f32
    %14 = vector.broadcast %cst_8 : f32 to vector<128x128xf32>
    %15 = arith.addf %14, %13 : vector<128x128xf32>
    %16 = arith.mulf %10, %15 : vector<128x128xf32>
    %c0_9 = arith.constant 0 : index
    %c0_10 = arith.constant 0 : index
    %17 = vector.load %arg15[%c0_9, %c0_10] : memref<128x128xf32, #tpu.memory_space<vmem>>, vector<128x128xf32>
    %cst_11 = arith.constant dense<0.000000e+00> : vector<128x128xf32>
    %18 = tpu.matmul %16, %17, %cst_11 {dimension_numbers = #tpu.dot_dimension_numbers<[1], [0], [0], [1], [0, 0, 1, 1], [], []>} : vector<128x128xf32>, vector<128x128xf32>, vector<128x128xf32> -> vector<128x128xf32>
    %c0_12 = arith.constant 0 : index
    %c0_13 = arith.constant 0 : index
    %19 = vector.load %arg20[%c0_12, %c0_13] : memref<1x128xf32, #tpu.memory_space<vmem>>, vector<1x128xf32>
    %20 = vector.broadcast %19 : vector<1x128xf32> to vector<128x128xf32>
    %21 = arith.addf %18, %20 : vector<128x128xf32>
    %cst_14 = arith.constant 5.000000e-01 : f32
    %22 = vector.broadcast %cst_14 : f32 to vector<128x128xf32>
    %23 = arith.mulf %22, %21 : vector<128x128xf32>
    %cst_15 = arith.constant 0.707106769 : f32
    %24 = vector.broadcast %cst_15 : f32 to vector<128x128xf32>
    %25 = arith.mulf %21, %24 : vector<128x128xf32>
    %26 = math.erf %25 : vector<128x128xf32>
    %cst_16 = arith.constant 1.000000e+00 : f32
    %27 = vector.broadcast %cst_16 : f32 to vector<128x128xf32>
    %28 = arith.addf %27, %26 : vector<128x128xf32>
    %29 = arith.mulf %23, %28 : vector<128x128xf32>
    %c0_17 = arith.constant 0 : index
    %c0_18 = arith.constant 0 : index
    %30 = vector.load %arg16[%c0_17, %c0_18] : memref<128x128xf32, #tpu.memory_space<vmem>>, vector<128x128xf32>
    %cst_19 = arith.constant dense<0.000000e+00> : vector<128x128xf32>
    %31 = tpu.matmul %29, %30, %cst_19 {dimension_numbers = #tpu.dot_dimension_numbers<[1], [0], [0], [1], [0, 0, 1, 1], [], []>} : vector<128x128xf32>, vector<128x128xf32>, vector<128x128xf32> -> vector<128x128xf32>
    %c0_20 = arith.constant 0 : index
    %c0_21 = arith.constant 0 : index
    %32 = vector.load %arg21[%c0_20, %c0_21] : memref<1x128xf32, #tpu.memory_space<vmem>>, vector<1x128xf32>
    %33 = vector.broadcast %32 : vector<1x128xf32> to vector<128x128xf32>
    %34 = arith.addf %31, %33 : vector<128x128xf32>
    %cst_22 = arith.constant 5.000000e-01 : f32
    %35 = vector.broadcast %cst_22 : f32 to vector<128x128xf32>
    %36 = arith.mulf %35, %34 : vector<128x128xf32>
    %cst_23 = arith.constant 0.707106769 : f32
    %37 = vector.broadcast %cst_23 : f32 to vector<128x128xf32>
    %38 = arith.mulf %34, %37 : vector<128x128xf32>
    %39 = math.erf %38 : vector<128x128xf32>
    %cst_24 = arith.constant 1.000000e+00 : f32
    %40 = vector.broadcast %cst_24 : f32 to vector<128x128xf32>
    %41 = arith.addf %40, %39 : vector<128x128xf32>
    %42 = arith.mulf %36, %41 : vector<128x128xf32>
    %c0_25 = arith.constant 0 : index
    %c0_26 = arith.constant 0 : index
    %43 = vector.load %arg17[%c0_25, %c0_26] : memref<128x128xf32, #tpu.memory_space<vmem>>, vector<128x128xf32>
    %cst_27 = arith.constant dense<0.000000e+00> : vector<128x128xf32>
    %44 = tpu.matmul %42, %43, %cst_27 {dimension_numbers = #tpu.dot_dimension_numbers<[1], [0], [0], [1], [0, 0, 1, 1], [], []>} : vector<128x128xf32>, vector<128x128xf32>, vector<128x128xf32> -> vector<128x128xf32>
    %c0_28 = arith.constant 0 : index
    %c0_29 = arith.constant 0 : index
    %45 = vector.load %arg22[%c0_28, %c0_29] : memref<1x128xf32, #tpu.memory_space<vmem>>, vector<1x128xf32>
    %46 = vector.broadcast %45 : vector<1x128xf32> to vector<128x128xf32>
    %47 = arith.addf %44, %46 : vector<128x128xf32>
    %cst_30 = arith.constant 5.000000e-01 : f32
    %48 = vector.broadcast %cst_30 : f32 to vector<128x128xf32>
    %49 = arith.mulf %48, %47 : vector<128x128xf32>
    %cst_31 = arith.constant 0.707106769 : f32
    %50 = vector.broadcast %cst_31 : f32 to vector<128x128xf32>
    %51 = arith.mulf %47, %50 : vector<128x128xf32>
    %52 = math.erf %51 : vector<128x128xf32>
    %cst_32 = arith.constant 1.000000e+00 : f32
    %53 = vector.broadcast %cst_32 : f32 to vector<128x128xf32>
    %54 = arith.addf %53, %52 : vector<128x128xf32>
    %55 = arith.mulf %49, %54 : vector<128x128xf32>
    %c0_33 = arith.constant 0 : index
    %c0_34 = arith.constant 0 : index
    %56 = vector.load %arg18[%c0_33, %c0_34] : memref<128x128xf32, #tpu.memory_space<vmem>>, vector<128x128xf32>
    %cst_35 = arith.constant dense<0.000000e+00> : vector<128x128xf32>
    %57 = tpu.matmul %55, %56, %cst_35 {dimension_numbers = #tpu.dot_dimension_numbers<[1], [0], [0], [1], [0, 0, 1, 1], [], []>} : vector<128x128xf32>, vector<128x128xf32>, vector<128x128xf32> -> vector<128x128xf32>
    %c0_36 = arith.constant 0 : index
    %c0_37 = arith.constant 0 : index
    %58 = vector.load %arg23[%c0_36, %c0_37] : memref<1x128xf32, #tpu.memory_space<vmem>>, vector<1x128xf32>
    %59 = vector.broadcast %58 : vector<1x128xf32> to vector<128x128xf32>
    %60 = arith.addf %57, %59 : vector<128x128xf32>
    %cst_38 = arith.constant 5.000000e-01 : f32
    %61 = vector.broadcast %cst_38 : f32 to vector<128x128xf32>
    %62 = arith.mulf %61, %60 : vector<128x128xf32>
    %cst_39 = arith.constant 0.707106769 : f32
    %63 = vector.broadcast %cst_39 : f32 to vector<128x128xf32>
    %64 = arith.mulf %60, %63 : vector<128x128xf32>
    %65 = math.erf %64 : vector<128x128xf32>
    %cst_40 = arith.constant 1.000000e+00 : f32
    %66 = vector.broadcast %cst_40 : f32 to vector<128x128xf32>
    %67 = arith.addf %66, %65 : vector<128x128xf32>
    %68 = arith.mulf %62, %67 : vector<128x128xf32>
    %c0_41 = arith.constant 0 : index
    %c0_42 = arith.constant 0 : index
    %69 = vector.load %arg25[%c0_41, %c0_42] : memref<8x128xf32, #tpu.memory_space<vmem>>, vector<8x128xf32>
    %cst_43 = arith.constant dense<0.000000e+00> : vector<8x128xf32>
    %70 = tpu.matmul %69, %68, %cst_43 {dimension_numbers = #tpu.dot_dimension_numbers<[1], [1], [0], [0], [0, 0, 1, 0], [], []>} : vector<8x128xf32>, vector<128x128xf32>, vector<8x128xf32> -> vector<8x128xf32>
    %c0_44 = arith.constant 0 : index
    %c0_45 = arith.constant 0 : index
    %c0_46 = arith.constant 0 : index
    %71 = vector.load %arg24[%c0_44, %c0_45, %c0_46] : memref<1x8x128xf32, #tpu.memory_space<vmem>>, vector<1x8x128xf32>
    %72 = vector.shape_cast %71 : vector<1x8x128xf32> to vector<8x128xf32>
    %73 = vector.shape_cast %70 : vector<8x128xf32> to vector<1x8x128xf32>
    tpu.vector_store %arg24[%c0_44, %c0_45, %c0_46], %73 {strides = array<i32>} : memref<1x8x128xf32, #tpu.memory_space<vmem>>, vector<1x8x128xf32>,
    return
  }
  func.func @transform_0(%arg0: i32, %arg1: i32) -> (i32, i32) {
    %c0_i32 = arith.constant 0 : i32
    %c0_i32_0 = arith.constant 0 : i32
    return %arg0, %c0_i32 : i32, i32
  }
  func.func @transform_1(%arg0: i32, %arg1: i32) -> (i32, i32) {
    %c0_i32 = arith.constant 0 : i32
    %c0_i32_0 = arith.constant 0 : i32
    return %arg1, %c0_i32 : i32, i32
  }
  func.func @transform_2(%arg0: i32, %arg1: i32) -> (i32, i32) {
    %c0_i32 = arith.constant 0 : i32
    %c0_i32_0 = arith.constant 0 : i32
    %c0_i32_1 = arith.constant 0 : i32
    return %c0_i32, %c0_i32_0 : i32, i32
  }
  func.func @transform_3(%arg0: i32, %arg1: i32) -> (i32, i32) {
    %c0_i32 = arith.constant 0 : i32
    %c0_i32_0 = arith.constant 0 : i32
    %c0_i32_1 = arith.constant 0 : i32
    return %c0_i32, %c0_i32_0 : i32, i32
  }
  func.func @transform_4(%arg0: i32, %arg1: i32) -> (i32, i32) {
    %c0_i32 = arith.constant 0 : i32
    %c0_i32_0 = arith.constant 0 : i32
    %c0_i32_1 = arith.constant 0 : i32
    return %c0_i32, %c0_i32_0 : i32, i32
  }
  func.func @transform_5(%arg0: i32, %arg1: i32) -> (i32, i32) {
    %c0_i32 = arith.constant 0 : i32
    %c0_i32_0 = arith.constant 0 : i32
    %c0_i32_1 = arith.constant 0 : i32
    return %c0_i32, %c0_i32_0 : i32, i32
  }
  func.func @transform_6(%arg0: i32, %arg1: i32) -> (i32, i32) {
    %c0_i32 = arith.constant 0 : i32
    %c0_i32_0 = arith.constant 0 : i32
    %c0_i32_1 = arith.constant 0 : i32
    return %c0_i32, %c0_i32_0 : i32, i32
  }
  func.func @transform_7(%arg0: i32, %arg1: i32) -> (i32, i32) {
    %c0_i32 = arith.constant 0 : i32
    %c0_i32_0 = arith.constant 0 : i32
    %c0_i32_1 = arith.constant 0 : i32
    return %c0_i32, %c0_i32_0 : i32, i32
  }
  func.func @transform_8(%arg0: i32, %arg1: i32) -> (i32, i32) {
    %c0_i32 = arith.constant 0 : i32
    %c0_i32_0 = arith.constant 0 : i32
    %c0_i32_1 = arith.constant 0 : i32
    return %c0_i32, %c0_i32_0 : i32, i32
  }
  func.func @transform_9(%arg0: i32, %arg1: i32) -> (i32, i32) {
    %c0_i32 = arith.constant 0 : i32
    %c0_i32_0 = arith.constant 0 : i32
    %c0_i32_1 = arith.constant 0 : i32
    return %c0_i32, %c0_i32_0 : i32, i32
  }
  func.func @transform_10(%arg0: i32, %arg1: i32) -> (i32, i32) {
    %c0_i32 = arith.constant 0 : i32
    %c0_i32_0 = arith.constant 0 : i32
    %c0_i32_1 = arith.constant 0 : i32
    return %c0_i32, %c0_i32_0 : i32, i32
  }
  func.func @transform_11(%arg0: i32, %arg1: i32) -> (i32, i32) {
    %c0_i32 = arith.constant 0 : i32
    %c0_i32_0 = arith.constant 0 : i32
    %c0_i32_1 = arith.constant 0 : i32
    return %c0_i32, %c0_i32_0 : i32, i32
  }
  func.func @transform_12(%arg0: i32, %arg1: i32) -> (i32, i32) {
    %c0_i32 = arith.constant 0 : i32
    %c0_i32_0 = arith.constant 0 : i32
    %c0_i32_1 = arith.constant 0 : i32
    return %c0_i32, %c0_i32_0 : i32, i32
  }
  func.func @transform_13(%arg0: i32, %arg1: i32) -> (i32, i32) {
    %c0_i32 = arith.constant 0 : i32
    %c0_i32_0 = arith.constant 0 : i32
    %c0_i32_1 = arith.constant 0 : i32
    return %c0_i32, %c0_i32_0 : i32, i32
  }
  func.func @transform_14(%arg0: i32, %arg1: i32) -> (i32, i32) {
    %c0_i32 = arith.constant 0 : i32
    %c0_i32_0 = arith.constant 0 : i32
    %c0_i32_1 = arith.constant 0 : i32
    return %c0_i32, %c0_i32_0 : i32, i32
  }
  func.func @transform_15(%arg0: i32, %arg1: i32) -> (i32, i32) {
    %c0_i32 = arith.constant 0 : i32
    %c0_i32_0 = arith.constant 0 : i32
    %c0_i32_1 = arith.constant 0 : i32
    return %c0_i32, %c0_i32_0 : i32, i32
  }
  func.func @transform_16(%arg0: i32, %arg1: i32) -> (i32, i32) {
    %c0_i32 = arith.constant 0 : i32
    %c0_i32_0 = arith.constant 0 : i32
    %c0_i32_1 = arith.constant 0 : i32
    return %c0_i32, %c0_i32_0 : i32, i32
  }
  func.func @transform_17(%arg0: i32, %arg1: i32) -> (i32, i32) {
    %c0_i32 = arith.constant 0 : i32
    %c0_i32_0 = arith.constant 0 : i32
    %c0_i32_1 = arith.constant 0 : i32
    return %c0_i32, %c0_i32_0 : i32, i32
  }
  func.func @transform_18(%arg0: i32, %arg1: i32) -> (i32, i32) {
    %c0_i32 = arith.constant 0 : i32
    %c0_i32_0 = arith.constant 0 : i32
    %c0_i32_1 = arith.constant 0 : i32
    return %c0_i32, %c0_i32_0 : i32, i32
  }
  func.func @transform_19(%arg0: i32, %arg1: i32) -> (i32, i32) {
    %c0_i32 = arith.constant 0 : i32
    %c0_i32_0 = arith.constant 0 : i32
    %c0_i32_1 = arith.constant 0 : i32
    return %c0_i32, %c0_i32_0 : i32, i32
  }
  func.func @transform_20(%arg0: i32, %arg1: i32) -> (i32, i32) {
    %c0_i32 = arith.constant 0 : i32
    %c0_i32_0 = arith.constant 0 : i32
    %c0_i32_1 = arith.constant 0 : i32
    return %c0_i32, %c0_i32_0 : i32, i32
  }
  func.func @transform_21(%arg0: i32, %arg1: i32) -> (i32, i32) {
    %c0_i32 = arith.constant 0 : i32
    %c0_i32_0 = arith.constant 0 : i32
    %c0_i32_1 = arith.constant 0 : i32
    return %c0_i32, %c0_i32_0 : i32, i32
  }
  func.func @transform_22(%arg0: i32, %arg1: i32) -> (i32, i32, i32) {
    %c0_i32 = arith.constant 0 : i32
    %c0_i32_0 = arith.constant 0 : i32
    return %c0_i32, %arg0, %arg1 : i32, i32, i32
  }
}

</mosaic_0001>

<llo_original>
// kernel: deeponet1d_forward.1
$region0: #{deeponet1d_forward.1}
  #allocation0 [shape = 'u32[]', space=smem, size = 0x4, offset = 0x4, fixed_abs, tag = 'smem constant byte address 0x4 - core index']
  #allocation1 [shape = 'u32[144,128]{1,0:T(1,128)}', space=vmem, size = 0x12000, scoped, tag = 'internal scratch']
  #allocation2 [shape = 'f32[8,128]{1,0:T(8,128)}', space=vmem, size = 0x1000, scoped, tag = 'scratch operand']
  %s0 = inlined_call_operand.vmem [shape: f32[8,16], index: 0, kind: input, shape index: {}]
  %s1 = inlined_call_operand.vmem [shape: f32[128,8], index: 1, kind: input, shape index: {}]
  %s2 = inlined_call_operand.vmem [shape: f32[16,128], index: 2, kind: input, shape index: {}]
  %s3 = inlined_call_operand.vmem [shape: f32[128,128], index: 3, kind: input, shape index: {}]
  %s4 = inlined_call_operand.hbm [shape: f32[128,128], index: 4, kind: input, shape index: {}]
  %s5 = inlined_call_operand.hbm [shape: f32[128,128], index: 5, kind: input, shape index: {}]
  %s6 = inlined_call_operand.hbm [shape: f32[128,128], index: 6, kind: input, shape index: {}]
  %s7 = inlined_call_operand.vmem [shape: f32[1,128], index: 7, kind: input, shape index: {}]
  %s8 = inlined_call_operand.vmem [shape: f32[1,128], index: 8, kind: input, shape index: {}]
  %s9 = inlined_call_operand.vmem [shape: f32[1,128], index: 9, kind: input, shape index: {}]
  %s10 = inlined_call_operand.vmem [shape: f32[1,128], index: 10, kind: input, shape index: {}]
  %s11 = inlined_call_operand.vmem [shape: f32[1,128], index: 11, kind: input, shape index: {}]
  %s12 = inlined_call_operand.vmem [shape: f32[8,128], index: 12, kind: input, shape index: {}]
  %s13 = inlined_call_operand.hbm [shape: f32[128,128], index: 13, kind: input, shape index: {}]
  %s14 = inlined_call_operand.hbm [shape: f32[128,128], index: 14, kind: input, shape index: {}]
  %s15 = inlined_call_operand.hbm [shape: f32[128,128], index: 15, kind: input, shape index: {}]
  %s16 = inlined_call_operand.hbm [shape: f32[128,128], index: 16, kind: input, shape index: {}]
  %s17 = inlined_call_operand.vmem [shape: f32[1,128], index: 17, kind: input, shape index: {}]
  %s18 = inlined_call_operand.vmem [shape: f32[1,128], index: 18, kind: input, shape index: {}]
  %s19 = inlined_call_operand.vmem [shape: f32[1,128], index: 19, kind: input, shape index: {}]
  %s20 = inlined_call_operand.vmem [shape: f32[1,128], index: 20, kind: input, shape index: {}]
  %s21 = inlined_call_operand.vmem [shape: f32[1,128], index: 21, kind: input, shape index: {}]
  %s22 = inlined_call_operand.vmem [shape: f32[1,8,128], index: 22, kind: output, shape index: {}]
  %s23 = sld [smem:[#allocation0]]
  $region130: #{deeponet1d_forward.1} parent=0
    _
  %s25 = ssub.s32 1, %s23
  %s26 = scalar_select 0, %s25, %s23
  $region1: #{deeponet1d_forward.1} parent=0
    #allocation3 [shape = 'u8[65536]{0}', space=vmem, size = 0x10000, scoped, tag = 'input window, operand 4, single buffered']
    #allocation4 [shape = 's32[1]{0}', space=sflag, size = 0x4, scoped, tag = 'scoped memory for deeponet1d_forward.1']
    #allocation5 [shape = 'u8[65536]{0}', space=vmem, size = 0x10000, scoped, tag = 'input window, operand 5, single buffered']
    #allocation6 [shape = 's32[1]{0}', space=sflag, size = 0x4, scoped, tag = 'scoped memory for deeponet1d_forward.1']
    #allocation7 [shape = 'u8[65536]{0}', space=vmem, size = 0x10000, scoped, tag = 'input window, operand 6, single buffered']
    #allocation8 [shape = 'u8[65536]{0}', space=vmem, size = 0x10000, scoped, tag = 'input window, operand 13, single buffered']
    #allocation9 [shape = 's32[1]{0}', space=sflag, size = 0x4, scoped, tag = 'scoped memory for deeponet1d_forward.1']
    #allocation10 [shape = 'u8[65536]{0}', space=vmem, size = 0x10000, scoped, tag = 'input window, operand 14, single buffered']
    #allocation11 [shape = 'u8[65536]{0}', space=vmem, size = 0x10000, scoped, tag = 'input window, operand 15, single buffered']
    #allocation12 [shape = 's32[1]{0}', space=sflag, size = 0x4, scoped, tag = 'scoped memory for deeponet1d_forward.1']
    #allocation13 [shape = 'u8[65536]{0}', space=vmem, size = 0x10000, scoped, tag = 'input window, operand 16, single buffered']
    %27 = vsyncpa [#allocation4], 0
    %28 = vsyncpa [#allocation6], 0
    %29 = vsyncpa [#allocation9], 0
    %30 = vsyncpa [#allocation12], 0
    // Predicated region
    $region2: #{deeponet1d_forward.1} parent=1 // pred_check
      _
    $region3: #{deeponet1d_forward.1} parent=1 // pred_check_branch
      %32 = sbr.rel (0) target = $region5
    $region4: #{deeponet1d_forward.1} parent=1 // pred_region
      _
    $region5: #{deeponet1d_forward.1} parent=1 // pred_fallthru
      _
    // Predicated region
    $region6: #{deeponet1d_forward.1} parent=1 // pred_check
      _
    $region7: #{deeponet1d_forward.1} parent=1 // pred_check_branch
      %34 = sbr.rel (0) target = $region9
    $region8: #{deeponet1d_forward.1} parent=1 // pred_region
      _
    $region9: #{deeponet1d_forward.1} parent=1 // pred_fallthru
      _
    // Predicated region
    $region10: #{deeponet1d_forward.1} parent=1 // pred_check
      _
    $region11: #{deeponet1d_forward.1} parent=1 // pred_check_branch
      %36 = sbr.rel (0) target = $region13
    $region12: #{deeponet1d_forward.1} parent=1 // pred_region
      _
    $region13: #{deeponet1d_forward.1} parent=1 // pred_fallthru
      _
    // Predicated region
    $region14: #{deeponet1d_forward.1} parent=1 // pred_check
      _
    $region15: #{deeponet1d_forward.1} parent=1 // pred_check_branch
      %38 = sbr.rel (0) target = $region17
    $region16: #{deeponet1d_forward.1} parent=1 // pred_region
      _
    $region17: #{deeponet1d_forward.1} parent=1 // pred_fallthru
      _
    // Predicated region
    $region18: #{deeponet1d_forward.1} parent=1 // pred_check
      _
    $region19: #{deeponet1d_forward.1} parent=1 // pred_check_branch
      %40 = sbr.rel (0) target = $region21
    $region20: #{deeponet1d_forward.1} parent=1 // pred_region
      %s42 = ssub.s32 2048, 2048
      %43 = vsyncadd [#allocation4], %s42
      %s44 = sshll.u32 [#allocation3], 4
      %s45 = int_to_ptr.vmem [resolvable:$true] %s44
      %50 = dma.hbm_to_vmem [thread:$0]  %s4, 2048, %s45, [#allocation4], 128, 128, 8
    $region21: #{deeponet1d_forward.1} parent=1 // pred_fallthru
      _
    // Predicated region
    $region22: #{deeponet1d_forward.1} parent=1 // pred_check
      _
    $region23: #{deeponet1d_forward.1} parent=1 // pred_check_branch
      %52 = sbr.rel (0) target = $region25
    $region24: #{deeponet1d_forward.1} parent=1 // pred_region
      %s54 = ssub.s32 2048, 2048
      %55 = vsyncadd [#allocation6], %s54
      %s56 = sshll.u32 [#allocation5], 4
      %s57 = int_to_ptr.vmem [resolvable:$true] %s56
      %62 = dma.hbm_to_vmem [thread:$0]  %s5, 2048, %s57, [#allocation6], 128, 128, 8
    $region25: #{deeponet1d_forward.1} parent=1 // pred_fallthru
      _
    // Predicated region
    $region26: #{deeponet1d_forward.1} parent=1 // pred_check
      _
    $region27: #{deeponet1d_forward.1} parent=1 // pred_check_branch
      %64 = sbr.rel (0) target = $region29
    $region28: #{deeponet1d_forward.1} parent=1 // pred_region
      %s66 = ssub.s32 2048, 2048
      %67 = vsyncadd [#allocation6], %s66
      %s68 = sshll.u32 [#allocation7], 4
      %s69 = int_to_ptr.vmem [resolvable:$true] %s68
      %74 = dma.hbm_to_vmem [thread:$0]  %s6, 2048, %s69, [#allocation6], 128, 128, 8
    $region29: #{deeponet1d_forward.1} parent=1 // pred_fallthru
      _
    // Predicated region
    $region30: #{deeponet1d_forward.1} parent=1 // pred_check
      _
    $region31: #{deeponet1d_forward.1} parent=1 // pred_check_branch
      %76 = sbr.rel (0) target = $region33
    $region32: #{deeponet1d_forward.1} parent=1 // pred_region
      _
    $region33: #{deeponet1d_forward.1} parent=1 // pred_fallthru
      _
    // Predicated region
    $region34: #{deeponet1d_forward.1} parent=1 // pred_check
      _
    $region35: #{deeponet1d_forward.1} parent=1 // pred_check_branch
      %78 = sbr.rel (0) target = $region37
    $region36: #{deeponet1d_forward.1} parent=1 // pred_region
      _
    $region37: #{deeponet1d_forward.1} parent=1 // pred_fallthru
      _
    // Predicated region
    $region38: #{deeponet1d_forward.1} parent=1 // pred_check
      _
    $region39: #{deeponet1d_forward.1} parent=1 // pred_check_branch
      %80 = sbr.rel (0) target = $region41
    $region40: #{deeponet1d_forward.1} parent=1 // pred_region
      _
    $region41: #{deeponet1d_forward.1} parent=1 // pred_fallthru
      _
    // Predicated region
    $region42: #{deeponet1d_forward.1} parent=1 // pred_check
      _
    $region43: #{deeponet1d_forward.1} parent=1 // pred_check_branch
      %82 = sbr.rel (0) target = $region45
    $region44: #{deeponet1d_forward.1} parent=1 // pred_region
      _
    $region45: #{deeponet1d_forward.1} parent=1 // pred_fallthru
      _
    // Predicated region
    $region46: #{deeponet1d_forward.1} parent=1 // pred_check
      _
    $region47: #{deeponet1d_forward.1} parent=1 // pred_check_branch
      %84 = sbr.rel (0) target = $region49
    $region48: #{deeponet1d_forward.1} parent=1 // pred_region
      _
    $region49: #{deeponet1d_forward.1} parent=1 // pred_fallthru
      _
    // Predicated region
    $region50: #{deeponet1d_forward.1} parent=1 // pred_check
      _
    $region51: #{deeponet1d_forward.1} parent=1 // pred_check_branch
      %86 = sbr.rel (0) target = $region53
    $region52: #{deeponet1d_forward.1} parent=1 // pred_region
      _
    $region53: #{deeponet1d_forward.1} parent=1 // pred_fallthru
      _
    // Predicated region
    $region54: #{deeponet1d_forward.1} parent=1 // pred_check
      _
    $region55: #{deeponet1d_forward.1} parent=1 // pred_check_branch
      %88 = sbr.rel (0) target = $region57
    $region56: #{deeponet1d_forward.1} parent=1 // pred_region
      %s90 = ssub.s32 2048, 2048
      %91 = vsyncadd [#allocation9], %s90
      %s92 = sshll.u32 [#allocation8], 4
      %s93 = int_to_ptr.vmem [resolvable:$true] %s92
      %98 = dma.hbm_to_vmem [thread:$0]  %s13, 2048, %s93, [#allocation9], 128, 128, 8
    $region57: #{deeponet1d_forward.1} parent=1 // pred_fallthru
      _
    // Predicated region
    $region58: #{deeponet1d_forward.1} parent=1 // pred_check
      _
    $region59: #{deeponet1d_forward.1} parent=1 // pred_check_branch
      %100 = sbr.rel (0) target = $region61
    $region60: #{deeponet1d_forward.1} parent=1 // pred_region
      %s102 = ssub.s32 2048, 2048
      %103 = vsyncadd [#allocation9], %s102
      %s104 = sshll.u32 [#allocation10], 4
      %s105 = int_to_ptr.vmem [resolvable:$true] %s104
      %110 = dma.hbm_to_vmem [thread:$0]  %s14, 2048, %s105, [#allocation9], 128, 128, 8
    $region61: #{deeponet1d_forward.1} parent=1 // pred_fallthru
      _
    // Predicated region
    $region62: #{deeponet1d_forward.1} parent=1 // pred_check
      _
    $region63: #{deeponet1d_forward.1} parent=1 // pred_check_branch
      %112 = sbr.rel (0) target = $region65
    $region64: #{deeponet1d_forward.1} parent=1 // pred_region
      %s114 = ssub.s32 2048, 2048
      %115 = vsyncadd [#allocation12], %s114
      %s116 = sshll.u32 [#allocation11], 4
      %s117 = int_to_ptr.vmem [resolvable:$true] %s116
      %122 = dma.hbm_to_vmem [thread:$0]  %s15, 2048, %s117, [#allocation12], 128, 128, 8
    $region65: #{deeponet1d_forward.1} parent=1 // pred_fallthru
      _
    // Predicated region
    $region66: #{deeponet1d_forward.1} parent=1 // pred_check
      _
    $region67: #{deeponet1d_forward.1} parent=1 // pred_check_branch
      %124 = sbr.rel (0) target = $region69
    $region68: #{deeponet1d_forward.1} parent=1 // pred_region
      %s126 = ssub.s32 2048, 2048
      %127 = vsyncadd [#allocation12], %s126
      %s128 = sshll.u32 [#allocation13], 4
      %s129 = int_to_ptr.vmem [resolvable:$true] %s128
      %134 = dma.hbm_to_vmem [thread:$0]  %s16, 2048, %s129, [#allocation12], 128, 128, 8
    $region69: #{deeponet1d_forward.1} parent=1 // pred_fallthru
      _
    // Predicated region
    $region70: #{deeponet1d_forward.1} parent=1 // pred_check
      _
    $region71: #{deeponet1d_forward.1} parent=1 // pred_check_branch
      %136 = sbr.rel (0) target = $region73
    $region72: #{deeponet1d_forward.1} parent=1 // pred_region
      _
    $region73: #{deeponet1d_forward.1} parent=1 // pred_fallthru
      _
    // Predicated region
    $region74: #{deeponet1d_forward.1} parent=1 // pred_check
      _
    $region75: #{deeponet1d_forward.1} parent=1 // pred_check_branch
      %138 = sbr.rel (0) target = $region77
    $region76: #{deeponet1d_forward.1} parent=1 // pred_region
      _
    $region77: #{deeponet1d_forward.1} parent=1 // pred_fallthru
      _
    // Predicated region
    $region78: #{deeponet1d_forward.1} parent=1 // pred_check
      _
    $region79: #{deeponet1d_forward.1} parent=1 // pred_check_branch
      %140 = sbr.rel (0) target = $region81
    $region80: #{deeponet1d_forward.1} parent=1 // pred_region
      _
    $region81: #{deeponet1d_forward.1} parent=1 // pred_fallthru
      _
    // Predicated region
    $region82: #{deeponet1d_forward.1} parent=1 // pred_check
      _
    $region83: #{deeponet1d_forward.1} parent=1 // pred_check_branch
      %142 = sbr.rel (0) target = $region85
    $region84: #{deeponet1d_forward.1} parent=1 // pred_region
      _
    $region85: #{deeponet1d_forward.1} parent=1 // pred_fallthru
      _
    // Predicated region
    $region86: #{deeponet1d_forward.1} parent=1 // pred_check
      _
    $region87: #{deeponet1d_forward.1} parent=1 // pred_check_branch
      %144 = sbr.rel (0) target = $region89
    $region88: #{deeponet1d_forward.1} parent=1 // pred_region
      _
    $region89: #{deeponet1d_forward.1} parent=1 // pred_fallthru
      _
    // Predicated region
    $region90: #{deeponet1d_forward.1} parent=1 // pred_check
      _
    $region91: #{deeponet1d_forward.1} parent=1 // pred_check_branch
      %146 = sbr.rel (0) target = $region93
    $region92: #{deeponet1d_forward.1} parent=1 // pred_region
      %147 = dma.done [#allocation4], 2048
    $region93: #{deeponet1d_forward.1} parent=1 // pred_fallthru
      _
    // Predicated region
    $region94: #{deeponet1d_forward.1} parent=1 // pred_check
      _
    $region95: #{deeponet1d_forward.1} parent=1 // pred_check_branch
      %149 = sbr.rel (0) target = $region97
    $region96: #{deeponet1d_forward.1} parent=1 // pred_region
      %150 = dma.done [#allocation6], 2048
    $region97: #{deeponet1d_forward.1} parent=1 // pred_fallthru
      _
    // Predicated region
    $region98: #{deeponet1d_forward.1} parent=1 // pred_check
      _
    $region99: #{deeponet1d_forward.1} parent=1 // pred_check_branch
      %152 = sbr.rel (0) target = $region101
    $region100: #{deeponet1d_forward.1} parent=1 // pred_region
      %153 = dma.done [#allocation6], 2048
    $region101: #{deeponet1d_forward.1} parent=1 // pred_fallthru
      _
    // Predicated region
    $region102: #{deeponet1d_forward.1} parent=1 // pred_check
      _
    $region103: #{deeponet1d_forward.1} parent=1 // pred_check_branch
      %155 = sbr.rel (0) target = $region105
    $region104: #{deeponet1d_forward.1} parent=1 // pred_region
      %156 = dma.done [#allocation9], 2048
    $region105: #{deeponet1d_forward.1} parent=1 // pred_fallthru
      _
    // Predicated region
    $region106: #{deeponet1d_forward.1} parent=1 // pred_check
      _
    $region107: #{deeponet1d_forward.1} parent=1 // pred_check_branch
      %158 = sbr.rel (0) target = $region109
    $region108: #{deeponet1d_forward.1} parent=1 // pred_region
      %159 = dma.done [#allocation9], 2048
    $region109: #{deeponet1d_forward.1} parent=1 // pred_fallthru
      _
    // Predicated region
    $region110: #{deeponet1d_forward.1} parent=1 // pred_check
      _
    $region111: #{deeponet1d_forward.1} parent=1 // pred_check_branch
      %161 = sbr.rel (0) target = $region113
    $region112: #{deeponet1d_forward.1} parent=1 // pred_region
      %162 = dma.done [#allocation12], 2048
    $region113: #{deeponet1d_forward.1} parent=1 // pred_fallthru
      _
    // Predicated region
    $region114: #{deeponet1d_forward.1} parent=1 // pred_check
      _
    $region115: #{deeponet1d_forward.1} parent=1 // pred_check_branch
      %164 = sbr.rel (0) target = $region117
    $region116: #{deeponet1d_forward.1} parent=1 // pred_region
      %165 = dma.done [#allocation12], 2048
    $region117: #{deeponet1d_forward.1} parent=1 // pred_fallthru
      _
    %p166 = scmp.eq.s32.totalorder 0, 0
    // Predicated region
    $region118: #{deeponet1d_forward.1} parent=1 // pred_check
      %p167 = pneg %p166
    $region119: #{deeponet1d_forward.1} parent=1 // pred_check_branch
      %169 = sbr.rel (%p167) target = $region121
    $region120: #{deeponet1d_forward.1} parent=1 // pred_region
      %v170 = vld [vmem:[%s0] sm:$0xff]
      %v171 = vld [vmem:[%s2] sm:$0xff]
      %v172 = vld [vmem:[%s2 + $0x8] sm:$0xff]
      %v173 = vld [vmem:[%s7] sm:$0x1]
      %v175 = vlaneseq
      %v176 = vshrl.u32 %v175, 7
      %v177 = vsub.s32 0, %v176
      %v178 = vrot.slane %v173, %v177
      %vm180 = vcmask 130048
      %v182 = vsel %vm180, %v170, 0
      %184 = vmatprep.subr.mxu0 0.0
      %185 = vmatpush1.msra.mxu0 0.0
      %186 = vmatprep.subr.mxu0 0.0
      %187 = vmatpush1.msra.mxu0 0.0
      %188 = vmatprep.subr.mxu0 0.0
      %189 = vmatpush1.msra.mxu0 0.0
      %190 = vmatprep.subr.mxu0 0.0
      %191 = vmatpush1.msra.mxu0 0.0
      %192 = vmatprep.subr.mxu0 0.0
      %193 = vmatpush1.msra.mxu0 0.0
      %194 = vmatprep.subr.mxu0 0.0
      %195 = vmatpush1.msra.mxu0 0.0
      %196 = vmatprep.subr.mxu0 0.0
      %197 = vmatpush1.msra.mxu0 0.0
      %198 = vmatprep.subr.mxu0 0.0
      %199 = vmatpush1.msra.mxu0 0.0
      %200 = vmatprep.subr.mxu0 0.0
      %201 = vmatpush1.msra.mxu0 0.0
      %202 = vmatprep.subr.mxu0 0.0
      %203 = vmatpush1.msra.mxu0 0.0
      %204 = vmatprep.subr.mxu0 0.0
      %205 = vmatpush1.msra.mxu0 0.0
      %206 = vmatprep.subr.mxu0 0.0
      %207 = vmatpush1.msra.mxu0 0.0
      %208 = vmatprep.subr.mxu0 0.0
      %209 = vmatpush1.msra.mxu0 0.0
      %210 = vmatprep.subr.mxu0 0.0
      %211 = vmatpush1.msra.mxu0 0.0
      %212 = vmatprep.subr.mxu0 0.0
      %213 = vmatpush1.msra.mxu0 %v172
      %214 = vmatprep.subr.mxu0 0.0
      %215 = vmatpush1.msra.mxu0 %v171
      %216 = vmatprep.subr.mxu0 0.0
      %217 = vmatpush2.msra.mxu0 0.0
      %218 = vmatprep.subr.mxu0 0.0
      %219 = vmatpush2.msra.mxu0 0.0
      %220 = vmatprep.subr.mxu0 0.0
      %221 = vmatpush2.msra.mxu0 0.0
      %222 = vmatprep.subr.mxu0 0.0
      %223 = vmatpush2.msra.mxu0 0.0
      %224 = vmatprep.subr.mxu0 0.0
      %225 = vmatpush2.msra.mxu0 0.0
      %226 = vmatprep.subr.mxu0 0.0
      %227 = vmatpush2.msra.mxu0 0.0
      %228 = vmatprep.subr.mxu0 0.0
      %229 = vmatpush2.msra.mxu0 0.0
      %230 = vmatprep.subr.mxu0 0.0
      %231 = vmatpush2.msra.mxu0 0.0
      %232 = vmatprep.subr.mxu0 0.0
      %233 = vmatpush2.msra.mxu0 0.0
      %234 = vmatprep.subr.mxu0 0.0
      %235 = vmatpush2.msra.mxu0 0.0
      %236 = vmatprep.subr.mxu0 0.0
      %237 = vmatpush2.msra.mxu0 0.0
      %238 = vmatprep.subr.mxu0 0.0
      %239 = vmatpush2.msra.mxu0 0.0
      %240 = vmatprep.subr.mxu0 0.0
      %241 = vmatpush2.msra.mxu0 0.0
      %242 = vmatprep.subr.mxu0 0.0
      %243 = vmatpush2.msra.mxu0 0.0
      %244 = vmatprep.subr.mxu0 0.0
      %245 = vmatpush2.msra.mxu0 0.0
      %246 = vmatprep.subr.mxu0 0.0
      %247 = vmatpush2.msra.mxu0 0.0
      %248 = vmatprep.mubr.f32.mxu0 0.0
      %249 = vmatmul.mubr.f32.gmra.mxu0 %v182
      %v250 = vpop.f32.mrf.mxu0
      %v251 = vadd.f32 %v178, %v250
      %v252 = vpop.f32.mrf.mxu0
      %253 = vdwg.mxu0
      %v254 = vmul.f32 %v251, 0.5
      %v255 = vmul.f32 %v251, 0.70710677
      %v256 = verf.f32.pop %v255
      %v257 = vadd.f32 %v256, 1.0
      %v258 = vmul.f32 %v254, %v257
      %v259 = vld [vmem:[%s3] sm:$0xff]
      %v260 = vld [vmem:[%s3 + $0x8] sm:$0xff]
      %v261 = vld [vmem:[%s3 + $0x10] sm:$0xff]
      %v262 = vld [vmem:[%s3 + $0x18] sm:$0xff]
      %v263 = vld [vmem:[%s3 + $0x20] sm:$0xff]
      %v264 = vld [vmem:[%s3 + $0x28] sm:$0xff]
      %v265 = vld [vmem:[%s3 + $0x30] sm:$0xff]
      %v266 = vld [vmem:[%s3 + $0x38] sm:$0xff]
      %v267 = vld [vmem:[%s3 + $0x40] sm:$0xff]
      %v268 = vld [vmem:[%s3 + $0x48] sm:$0xff]
      %v269 = vld [vmem:[%s3 + $0x50] sm:$0xff]
      %v270 = vld [vmem:[%s3 + $0x58] sm:$0xff]
      %v271 = vld [vmem:[%s3 + $0x60] sm:$0xff]
      %v272 = vld [vmem:[%s3 + $0x68] sm:$0xff]
      %v273 = vld [vmem:[%s3 + $0x70] sm:$0xff]
      %v274 = vld [vmem:[%s3 + $0x78] sm:$0xff]
      %v275 = vld [vmem:[%s8] sm:$0x1]
      %v277 = vlaneseq
      %v278 = vshrl.u32 %v277, 7
      %v279 = vsub.s32 0, %v278
      %v280 = vrot.slane %v275, %v279
      %282 = vmatprep.subr.mxu0 0.0
      %283 = vmatpush1.msra.mxu0 %v274
      %284 = vmatprep.subr.mxu0 0.0
      %285 = vmatpush1.msra.mxu0 %v273
      %286 = vmatprep.subr.mxu0 0.0
      %287 = vmatpush1.msra.mxu0 %v272
      %288 = vmatprep.subr.mxu0 0.0
      %289 = vmatpush1.msra.mxu0 %v271
      %290 = vmatprep.subr.mxu0 0.0
      %291 = vmatpush1.msra.mxu0 %v270
      %292 = vmatprep.subr.mxu0 0.0
      %293 = vmatpush1.msra.mxu0 %v269
      %294 = vmatprep.subr.mxu0 0.0
      %295 = vmatpush1.msra.mxu0 %v268
      %296 = vmatprep.subr.mxu0 0.0
      %297 = vmatpush1.msra.mxu0 %v267
      %298 = vmatprep.subr.mxu0 0.0
      %299 = vmatpush1.msra.mxu0 %v266
      %300 = vmatprep.subr.mxu0 0.0
      %301 = vmatpush1.msra.mxu0 %v265
      %302 = vmatprep.subr.mxu0 0.0
      %303 = vmatpush1.msra.mxu0 %v264
      %304 = vmatprep.subr.mxu0 0.0
      %305 = vmatpush1.msra.mxu0 %v263
      %306 = vmatprep.subr.mxu0 0.0
      %307 = vmatpush1.msra.mxu0 %v262
      %308 = vmatprep.subr.mxu0 0.0
      %309 = vmatpush1.msra.mxu0 %v261
      %310 = vmatprep.subr.mxu0 0.0
      %311 = vmatpush1.msra.mxu0 %v260
      %312 = vmatprep.subr.mxu0 0.0
      %313 = vmatpush1.msra.mxu0 %v259
      %314 = vmatprep.subr.mxu0 0.0
      %315 = vmatpush2.msra.mxu0 0.0
      %316 = vmatprep.subr.mxu0 0.0
      %317 = vmatpush2.msra.mxu0 0.0
      %318 = vmatprep.subr.mxu0 0.0
      %319 = vmatpush2.msra.mxu0 0.0
      %320 = vmatprep.subr.mxu0 0.0
      %321 = vmatpush2.msra.mxu0 0.0
      %322 = vmatprep.subr.mxu0 0.0
      %323 = vmatpush2.msra.mxu0 0.0
      %324 = vmatprep.subr.mxu0 0.0
      %325 = vmatpush2.msra.mxu0 0.0
      %326 = vmatprep.subr.mxu0 0.0
      %327 = vmatpush2.msra.mxu0 0.0
      %328 = vmatprep.subr.mxu0 0.0
      %329 = vmatpush2.msra.mxu0 0.0
      %330 = vmatprep.subr.mxu0 0.0
      %331 = vmatpush2.msra.mxu0 0.0
      %332 = vmatprep.subr.mxu0 0.0
      %333 = vmatpush2.msra.mxu0 0.0
      %334 = vmatprep.subr.mxu0 0.0
      %335 = vmatpush2.msra.mxu0 0.0
      %336 = vmatprep.subr.mxu0 0.0
      %337 = vmatpush2.msra.mxu0 0.0
      %338 = vmatprep.subr.mxu0 0.0
      %339 = vmatpush2.msra.mxu0 0.0
      %340 = vmatprep.subr.mxu0 0.0
      %341 = vmatpush2.msra.mxu0 0.0
      %342 = vmatprep.subr.mxu0 0.0
      %343 = vmatpush2.msra.mxu0 0.0
      %344 = vmatprep.subr.mxu0 0.0
      %345 = vmatpush2.msra.mxu0 0.0
      %346 = vmatprep.mubr.f32.mxu0 0.0
      %347 = vmatmul.mubr.f32.gmra.mxu0 %v258
      %v348 = vpop.f32.mrf.mxu0
      %v349 = vadd.f32 %v280, %v348
      %v350 = vpop.f32.mrf.mxu0
      %351 = vdwg.mxu0
      %v352 = vmul.f32 %v349, 0.5
      %v353 = vmul.f32 %v349, 0.70710677
      %v354 = verf.f32.pop %v353
      %v355 = vadd.f32 %v354, 1.0
      %v356 = vmul.f32 %v352, %v355
      %v357 = vld [vmem:[#allocation3] sm:$0xff]
      %v358 = vld [vmem:[#allocation3 + $0x8] sm:$0xff]
      %v359 = vld [vmem:[#allocation3 + $0x10] sm:$0xff]
      %v360 = vld [vmem:[#allocation3 + $0x18] sm:$0xff]
      %v361 = vld [vmem:[#allocation3 + $0x20] sm:$0xff]
      %v362 = vld [vmem:[#allocation3 + $0x28] sm:$0xff]
      %v363 = vld [vmem:[#allocation3 + $0x30] sm:$0xff]
      %v364 = vld [vmem:[#allocation3 + $0x38] sm:$0xff]
      %v365 = vld [vmem:[#allocation3 + $0x40] sm:$0xff]
      %v366 = vld [vmem:[#allocation3 + $0x48] sm:$0xff]
      %v367 = vld [vmem:[#allocation3 + $0x50] sm:$0xff]
      %v368 = vld [vmem:[#allocation3 + $0x58] sm:$0xff]
      %v369 = vld [vmem:[#allocation3 + $0x60] sm:$0xff]
      %v370 = vld [vmem:[#allocation3 + $0x68] sm:$0xff]
      %v371 = vld [vmem:[#allocation3 + $0x70] sm:$0xff]
      %v372 = vld [vmem:[#allocation3 + $0x78] sm:$0xff]
      %v373 = vld [vmem:[%s9] sm:$0x1]
      %v375 = vlaneseq
      %v376 = vshrl.u32 %v375, 7
      %v377 = vsub.s32 0, %v376
      %v378 = vrot.slane %v373, %v377
      %380 = vmatprep.subr.mxu0 0.0
      %381 = vmatpush1.msra.mxu0 %v372
      %382 = vmatprep.subr.mxu0 0.0
      %383 = vmatpush1.msra.mxu0 %v371
      %384 = vmatprep.subr.mxu0 0.0
      %385 = vmatpush1.msra.mxu0 %v370
      %386 = vmatprep.subr.mxu0 0.0
      %387 = vmatpush1.msra.mxu0 %v369
      %388 = vmatprep.subr.mxu0 0.0
      %389 = vmatpush1.msra.mxu0 %v368
      %390 = vmatprep.subr.mxu0 0.0
      %391 = vmatpush1.msra.mxu0 %v367
      %392 = vmatprep.subr.mxu0 0.0
      %393 = vmatpush1.msra.mxu0 %v366
      %394 = vmatprep.subr.mxu0 0.0
      %395 = vmatpush1.msra.mxu0 %v365
      %396 = vmatprep.subr.mxu0 0.0
      %397 = vmatpush1.msra.mxu0 %v364
      %398 = vmatprep.subr.mxu0 0.0
      %399 = vmatpush1.msra.mxu0 %v363
      %400 = vmatprep.subr.mxu0 0.0
      %401 = vmatpush1.msra.mxu0 %v362
      %402 = vmatprep.subr.mxu0 0.0
      %403 = vmatpush1.msra.mxu0 %v361
      %404 = vmatprep.subr.mxu0 0.0
      %405 = vmatpush1.msra.mxu0 %v360
      %406 = vmatprep.subr.mxu0 0.0
      %407 = vmatpush1.msra.mxu0 %v359
      %408 = vmatprep.subr.mxu0 0.0
      %409 = vmatpush1.msra.mxu0 %v358
      %410 = vmatprep.subr.mxu0 0.0
      %411 = vmatpush1.msra.mxu0 %v357
      %412 = vmatprep.subr.mxu0 0.0
      %413 = vmatpush2.msra.mxu0 0.0
      %414 = vmatprep.subr.mxu0 0.0
      %415 = vmatpush2.msra.mxu0 0.0
      %416 = vmatprep.subr.mxu0 0.0
      %417 = vmatpush2.msra.mxu0 0.0
      %418 = vmatprep.subr.mxu0 0.0
      %419 = vmatpush2.msra.mxu0 0.0
      %420 = vmatprep.subr.mxu0 0.0
      %421 = vmatpush2.msra.mxu0 0.0
      %422 = vmatprep.subr.mxu0 0.0
      %423 = vmatpush2.msra.mxu0 0.0
      %424 = vmatprep.subr.mxu0 0.0
      %425 = vmatpush2.msra.mxu0 0.0
      %426 = vmatprep.subr.mxu0 0.0
      %427 = vmatpush2.msra.mxu0 0.0
      %428 = vmatprep.subr.mxu0 0.0
      %429 = vmatpush2.msra.mxu0 0.0
      %430 = vmatprep.subr.mxu0 0.0
      %431 = vmatpush2.msra.mxu0 0.0
      %432 = vmatprep.subr.mxu0 0.0
      %433 = vmatpush2.msra.mxu0 0.0
      %434 = vmatprep.subr.mxu0 0.0
      %435 = vmatpush2.msra.mxu0 0.0
      %436 = vmatprep.subr.mxu0 0.0
      %437 = vmatpush2.msra.mxu0 0.0
      %438 = vmatprep.subr.mxu0 0.0
      %439 = vmatpush2.msra.mxu0 0.0
      %440 = vmatprep.subr.mxu0 0.0
      %441 = vmatpush2.msra.mxu0 0.0
      %442 = vmatprep.subr.mxu0 0.0
      %443 = vmatpush2.msra.mxu0 0.0
      %444 = vmatprep.mubr.f32.mxu0 0.0
      %445 = vmatmul.mubr.f32.gmra.mxu0 %v356
      %v446 = vpop.f32.mrf.mxu0
      %v447 = vadd.f32 %v378, %v446
      %v448 = vpop.f32.mrf.mxu0
      %449 = vdwg.mxu0
      %v450 = vmul.f32 %v447, 0.5
      %v451 = vmul.f32 %v447, 0.70710677
      %v452 = verf.f32.pop %v451
      %v453 = vadd.f32 %v452, 1.0
      %v454 = vmul.f32 %v450, %v453
      %v455 = vld [vmem:[#allocation5] sm:$0xff]
      %v456 = vld [vmem:[#allocation5 + $0x8] sm:$0xff]
      %v457 = vld [vmem:[#allocation5 + $0x10] sm:$0xff]
      %v458 = vld [vmem:[#allocation5 + $0x18] sm:$0xff]
      %v459 = vld [vmem:[#allocation5 + $0x20] sm:$0xff]
      %v460 = vld [vmem:[#allocation5 + $0x28] sm:$0xff]
      %v461 = vld [vmem:[#allocation5 + $0x30] sm:$0xff]
      %v462 = vld [vmem:[#allocation5 + $0x38] sm:$0xff]
      %v463 = vld [vmem:[#allocation5 + $0x40] sm:$0xff]
      %v464 = vld [vmem:[#allocation5 + $0x48] sm:$0xff]
      %v465 = vld [vmem:[#allocation5 + $0x50] sm:$0xff]
      %v466 = vld [vmem:[#allocation5 + $0x58] sm:$0xff]
      %v467 = vld [vmem:[#allocation5 + $0x60] sm:$0xff]
      %v468 = vld [vmem:[#allocation5 + $0x68] sm:$0xff]
      %v469 = vld [vmem:[#allocation5 + $0x70] sm:$0xff]
      %v470 = vld [vmem:[#allocation5 + $0x78] sm:$0xff]
      %v471 = vld [vmem:[%s10] sm:$0x1]
      %v473 = vlaneseq
      %v474 = vshrl.u32 %v473, 7
      %v475 = vsub.s32 0, %v474
      %v476 = vrot.slane %v471, %v475
      %478 = vmatprep.subr.mxu0 0.0
      %479 = vmatpush1.msra.mxu0 %v470
      %480 = vmatprep.subr.mxu0 0.0
      %481 = vmatpush1.msra.mxu0 %v469
      %482 = vmatprep.subr.mxu0 0.0
      %483 = vmatpush1.msra.mxu0 %v468
      %484 = vmatprep.subr.mxu0 0.0
      %485 = vmatpush1.msra.mxu0 %v467
      %486 = vmatprep.subr.mxu0 0.0
      %487 = vmatpush1.msra.mxu0 %v466
      %488 = vmatprep.subr.mxu0 0.0
      %489 = vmatpush1.msra.mxu0 %v465
      %490 = vmatprep.subr.mxu0 0.0
      %491 = vmatpush1.msra.mxu0 %v464
      %492 = vmatprep.subr.mxu0 0.0
      %493 = vmatpush1.msra.mxu0 %v463
      %494 = vmatprep.subr.mxu0 0.0
      %495 = vmatpush1.msra.mxu0 %v462
      %496 = vmatprep.subr.mxu0 0.0
      %497 = vmatpush1.msra.mxu0 %v461
      %498 = vmatprep.subr.mxu0 0.0
      %499 = vmatpush1.msra.mxu0 %v460
      %500 = vmatprep.subr.mxu0 0.0
      %501 = vmatpush1.msra.mxu0 %v459
      %502 = vmatprep.subr.mxu0 0.0
      %503 = vmatpush1.msra.mxu0 %v458
      %504 = vmatprep.subr.mxu0 0.0
      %505 = vmatpush1.msra.mxu0 %v457
      %506 = vmatprep.subr.mxu0 0.0
      %507 = vmatpush1.msra.mxu0 %v456
      %508 = vmatprep.subr.mxu0 0.0
      %509 = vmatpush1.msra.mxu0 %v455
      %510 = vmatprep.subr.mxu0 0.0
      %511 = vmatpush2.msra.mxu0 0.0
      %512 = vmatprep.subr.mxu0 0.0
      %513 = vmatpush2.msra.mxu0 0.0
      %514 = vmatprep.subr.mxu0 0.0
      %515 = vmatpush2.msra.mxu0 0.0
      %516 = vmatprep.subr.mxu0 0.0
      %517 = vmatpush2.msra.mxu0 0.0
      %518 = vmatprep.subr.mxu0 0.0
      %519 = vmatpush2.msra.mxu0 0.0
      %520 = vmatprep.subr.mxu0 0.0
      %521 = vmatpush2.msra.mxu0 0.0
      %522 = vmatprep.subr.mxu0 0.0
      %523 = vmatpush2.msra.mxu0 0.0
      %524 = vmatprep.subr.mxu0 0.0
      %525 = vmatpush2.msra.mxu0 0.0
      %526 = vmatprep.subr.mxu0 0.0
      %527 = vmatpush2.msra.mxu0 0.0
      %528 = vmatprep.subr.mxu0 0.0
      %529 = vmatpush2.msra.mxu0 0.0
      %530 = vmatprep.subr.mxu0 0.0
      %531 = vmatpush2.msra.mxu0 0.0
      %532 = vmatprep.subr.mxu0 0.0
      %533 = vmatpush2.msra.mxu0 0.0
      %534 = vmatprep.subr.mxu0 0.0
      %535 = vmatpush2.msra.mxu0 0.0
      %536 = vmatprep.subr.mxu0 0.0
      %537 = vmatpush2.msra.mxu0 0.0
      %538 = vmatprep.subr.mxu0 0.0
      %539 = vmatpush2.msra.mxu0 0.0
      %540 = vmatprep.subr.mxu0 0.0
      %541 = vmatpush2.msra.mxu0 0.0
      %542 = vmatprep.mubr.f32.mxu0 0.0
      %543 = vmatmul.mubr.f32.gmra.mxu0 %v454
      %v544 = vpop.f32.mrf.mxu0
      %v545 = vadd.f32 %v476, %v544
      %v546 = vpop.f32.mrf.mxu0
      %547 = vdwg.mxu0
      %v548 = vmul.f32 %v545, 0.5
      %v549 = vmul.f32 %v545, 0.70710677
      %v550 = verf.f32.pop %v549
      %v551 = vadd.f32 %v550, 1.0
      %v552 = vmul.f32 %v548, %v551
      %v553 = vld [vmem:[#allocation7] sm:$0xff]
      %v554 = vld [vmem:[#allocation7 + $0x8] sm:$0xff]
      %v555 = vld [vmem:[#allocation7 + $0x10] sm:$0xff]
      %v556 = vld [vmem:[#allocation7 + $0x18] sm:$0xff]
      %v557 = vld [vmem:[#allocation7 + $0x20] sm:$0xff]
      %v558 = vld [vmem:[#allocation7 + $0x28] sm:$0xff]
      %v559 = vld [vmem:[#allocation7 + $0x30] sm:$0xff]
      %v560 = vld [vmem:[#allocation7 + $0x38] sm:$0xff]
      %v561 = vld [vmem:[#allocation7 + $0x40] sm:$0xff]
      %v562 = vld [vmem:[#allocation7 + $0x48] sm:$0xff]
      %v563 = vld [vmem:[#allocation7 + $0x50] sm:$0xff]
      %v564 = vld [vmem:[#allocation7 + $0x58] sm:$0xff]
      %v565 = vld [vmem:[#allocation7 + $0x60] sm:$0xff]
      %v566 = vld [vmem:[#allocation7 + $0x68] sm:$0xff]
      %v567 = vld [vmem:[#allocation7 + $0x70] sm:$0xff]
      %v568 = vld [vmem:[#allocation7 + $0x78] sm:$0xff]
      %v569 = vld [vmem:[%s11] sm:$0x1]
      %v571 = vlaneseq
      %v572 = vshrl.u32 %v571, 7
      %v573 = vsub.s32 0, %v572
      %v574 = vrot.slane %v569, %v573
      %576 = vmatprep.subr.mxu0 0.0
      %577 = vmatpush1.msra.mxu0 %v568
      %578 = vmatprep.subr.mxu0 0.0
      %579 = vmatpush1.msra.mxu0 %v567
      %580 = vmatprep.subr.mxu0 0.0
      %581 = vmatpush1.msra.mxu0 %v566
      %582 = vmatprep.subr.mxu0 0.0
      %583 = vmatpush1.msra.mxu0 %v565
      %584 = vmatprep.subr.mxu0 0.0
      %585 = vmatpush1.msra.mxu0 %v564
      %586 = vmatprep.subr.mxu0 0.0
      %587 = vmatpush1.msra.mxu0 %v563
      %588 = vmatprep.subr.mxu0 0.0
      %589 = vmatpush1.msra.mxu0 %v562
      %590 = vmatprep.subr.mxu0 0.0
      %591 = vmatpush1.msra.mxu0 %v561
      %592 = vmatprep.subr.mxu0 0.0
      %593 = vmatpush1.msra.mxu0 %v560
      %594 = vmatprep.subr.mxu0 0.0
      %595 = vmatpush1.msra.mxu0 %v559
      %596 = vmatprep.subr.mxu0 0.0
      %597 = vmatpush1.msra.mxu0 %v558
      %598 = vmatprep.subr.mxu0 0.0
      %599 = vmatpush1.msra.mxu0 %v557
      %600 = vmatprep.subr.mxu0 0.0
      %601 = vmatpush1.msra.mxu0 %v556
      %602 = vmatprep.subr.mxu0 0.0
      %603 = vmatpush1.msra.mxu0 %v555
      %604 = vmatprep.subr.mxu0 0.0
      %605 = vmatpush1.msra.mxu0 %v554
      %606 = vmatprep.subr.mxu0 0.0
      %607 = vmatpush1.msra.mxu0 %v553
      %608 = vmatprep.subr.mxu0 0.0
      %609 = vmatpush2.msra.mxu0 0.0
      %610 = vmatprep.subr.mxu0 0.0
      %611 = vmatpush2.msra.mxu0 0.0
      %612 = vmatprep.subr.mxu0 0.0
      %613 = vmatpush2.msra.mxu0 0.0
      %614 = vmatprep.subr.mxu0 0.0
      %615 = vmatpush2.msra.mxu0 0.0
      %616 = vmatprep.subr.mxu0 0.0
      %617 = vmatpush2.msra.mxu0 0.0
      %618 = vmatprep.subr.mxu0 0.0
      %619 = vmatpush2.msra.mxu0 0.0
      %620 = vmatprep.subr.mxu0 0.0
      %621 = vmatpush2.msra.mxu0 0.0
      %622 = vmatprep.subr.mxu0 0.0
      %623 = vmatpush2.msra.mxu0 0.0
      %624 = vmatprep.subr.mxu0 0.0
      %625 = vmatpush2.msra.mxu0 0.0
      %626 = vmatprep.subr.mxu0 0.0
      %627 = vmatpush2.msra.mxu0 0.0
      %628 = vmatprep.subr.mxu0 0.0
      %629 = vmatpush2.msra.mxu0 0.0
      %630 = vmatprep.subr.mxu0 0.0
      %631 = vmatpush2.msra.mxu0 0.0
      %632 = vmatprep.subr.mxu0 0.0
      %633 = vmatpush2.msra.mxu0 0.0
      %634 = vmatprep.subr.mxu0 0.0
      %635 = vmatpush2.msra.mxu0 0.0
      %636 = vmatprep.subr.mxu0 0.0
      %637 = vmatpush2.msra.mxu0 0.0
      %638 = vmatprep.subr.mxu0 0.0
      %639 = vmatpush2.msra.mxu0 0.0
      %640 = vmatprep.mubr.f32.mxu0 0.0
      %641 = vmatmul.mubr.f32.gmra.mxu0 %v552
      %v642 = vpop.f32.mrf.mxu0
      %v643 = vadd.f32 %v574, %v642
      %v644 = vpop.f32.mrf.mxu0
      %645 = vdwg.mxu0
      %646 = vst [vmem:[#allocation2] sm:$0xff] %v643
    $region121: #{deeponet1d_forward.1} parent=1 // pred_fallthru
      _
    %v647 = vld [vmem:[%s1] sm:$0xff]
    %v648 = vld [vmem:[%s1 + $0x8] sm:$0xff]
    %v649 = vld [vmem:[%s1 + $0x10] sm:$0xff]
    %v650 = vld [vmem:[%s1 + $0x18] sm:$0xff]
    %v651 = vld [vmem:[%s1 + $0x20] sm:$0xff]
    %v652 = vld [vmem:[%s1 + $0x28] sm:$0xff]
    %v653 = vld [vmem:[%s1 + $0x30] sm:$0xff]
    %v654 = vld [vmem:[%s1 + $0x38] sm:$0xff]
    %v655 = vld [vmem:[%s1 + $0x40] sm:$0xff]
    %v656 = vld [vmem:[%s1 + $0x48] sm:$0xff]
    %v657 = vld [vmem:[%s1 + $0x50] sm:$0xff]
    %v658 = vld [vmem:[%s1 + $0x58] sm:$0xff]
    %v659 = vld [vmem:[%s1 + $0x60] sm:$0xff]
    %v660 = vld [vmem:[%s1 + $0x68] sm:$0xff]
    %v661 = vld [vmem:[%s1 + $0x70] sm:$0xff]
    %v662 = vld [vmem:[%s1 + $0x78] sm:$0xff]
    %v663 = vld [vmem:[%s12] sm:$0xff]
    %v664 = vld [vmem:[%s17] sm:$0x1]
    %v666 = vlaneseq
    %v667 = vshrl.u32 %v666, 7
    %v668 = vsub.s32 0, %v667
    %v669 = vrot.slane %v664, %v668
    %vm671 = vcmask 64512
    %v673 = vsel %vm671, %v647, 0
    %v676 = vsel %vm671, %v648, 0
    %v679 = vsel %vm671, %v649, 0
    %v682 = vsel %vm671, %v650, 0
    %v685 = vsel %vm671, %v651, 0
    %v688 = vsel %vm671, %v652, 0
    %v691 = vsel %vm671, %v653, 0
    %v694 = vsel %vm671, %v654, 0
    %v697 = vsel %vm671, %v655, 0
    %v700 = vsel %vm671, %v656, 0
    %v703 = vsel %vm671, %v657, 0
    %v706 = vsel %vm671, %v658, 0
    %v709 = vsel %vm671, %v659, 0
    %v712 = vsel %vm671, %v660, 0
    %v715 = vsel %vm671, %v661, 0
    %v718 = vsel %vm671, %v662, 0
    %720 = vmatprep.subr.mxu0 0.0
    %721 = vmatpush1.msra.mxu0 0.0
    %722 = vmatprep.subr.mxu0 0.0
    %723 = vmatpush1.msra.mxu0 0.0
    %724 = vmatprep.subr.mxu0 0.0
    %725 = vmatpush1.msra.mxu0 0.0
    %726 = vmatprep.subr.mxu0 0.0
    %727 = vmatpush1.msra.mxu0 0.0
    %728 = vmatprep.subr.mxu0 0.0
    %729 = vmatpush1.msra.mxu0 0.0
    %730 = vmatprep.subr.mxu0 0.0
    %731 = vmatpush1.msra.mxu0 0.0
    %732 = vmatprep.subr.mxu0 0.0
    %733 = vmatpush1.msra.mxu0 0.0
    %734 = vmatprep.subr.mxu0 0.0
    %735 = vmatpush1.msra.mxu0 0.0
    %736 = vmatprep.subr.mxu0 0.0
    %737 = vmatpush1.msra.mxu0 0.0
    %738 = vmatprep.subr.mxu0 0.0
    %739 = vmatpush1.msra.mxu0 0.0
    %740 = vmatprep.subr.mxu0 0.0
    %741 = vmatpush1.msra.mxu0 0.0
    %742 = vmatprep.subr.mxu0 0.0
    %743 = vmatpush1.msra.mxu0 0.0
    %744 = vmatprep.subr.mxu0 0.0
    %745 = vmatpush1.msra.mxu0 0.0
    %746 = vmatprep.subr.mxu0 0.0
    %747 = vmatpush1.msra.mxu0 0.0
    %748 = vmatprep.subr.mxu0 0.0
    %749 = vmatpush1.msra.mxu0 0.0
    %750 = vmatprep.subr.mxu0 0.0
    %751 = vmatpush1.msra.mxu0 %v663
    %752 = vmatprep.subr.mxu0 0.0
    %753 = vmatpush2.msra.mxu0 0.0
    %754 = vmatprep.subr.mxu0 0.0
    %755 = vmatpush2.msra.mxu0 0.0
    %756 = vmatprep.subr.mxu0 0.0
    %757 = vmatpush2.msra.mxu0 0.0
    %758 = vmatprep.subr.mxu0 0.0
    %759 = vmatpush2.msra.mxu0 0.0
    %760 = vmatprep.subr.mxu0 0.0
    %761 = vmatpush2.msra.mxu0 0.0
    %762 = vmatprep.subr.mxu0 0.0
    %763 = vmatpush2.msra.mxu0 0.0
    %764 = vmatprep.subr.mxu0 0.0
    %765 = vmatpush2.msra.mxu0 0.0
    %766 = vmatprep.subr.mxu0 0.0
    %767 = vmatpush2.msra.mxu0 0.0
    %768 = vmatprep.subr.mxu0 0.0
    %769 = vmatpush2.msra.mxu0 0.0
    %770 = vmatprep.subr.mxu0 0.0
    %771 = vmatpush2.msra.mxu0 0.0
    %772 = vmatprep.subr.mxu0 0.0
    %773 = vmatpush2.msra.mxu0 0.0
    %774 = vmatprep.subr.mxu0 0.0
    %775 = vmatpush2.msra.mxu0 0.0
    %776 = vmatprep.subr.mxu0 0.0
    %777 = vmatpush2.msra.mxu0 0.0
    %778 = vmatprep.subr.mxu0 0.0
    %779 = vmatpush2.msra.mxu0 0.0
    %780 = vmatprep.subr.mxu0 0.0
    %781 = vmatpush2.msra.mxu0 0.0
    %782 = vmatprep.subr.mxu0 0.0
    %783 = vmatpush2.msra.mxu0 0.0
    %784 = vmatprep.mubr.f32.mxu0 0.0
    %785 = vmatmul.mubr.f32.gmra.mxu0 %v673
    %v786 = vpop.f32.mrf.mxu0
    %v787 = vadd.f32 %v669, %v786
    %v788 = vpop.f32.mrf.mxu0
    %789 = vmatprep.mubr.f32.mxu0 0.0
    %790 = vmatmul.mubr.f32.gmra.mxu0 %v676
    %v791 = vpop.f32.mrf.mxu0
    %v792 = vadd.f32 %v669, %v791
    %v793 = vpop.f32.mrf.mxu0
    %794 = vmatprep.mubr.f32.mxu0 0.0
    %795 = vmatmul.mubr.f32.gmra.mxu0 %v679
    %v796 = vpop.f32.mrf.mxu0
    %v797 = vadd.f32 %v669, %v796
    %v798 = vpop.f32.mrf.mxu0
    %799 = vmatprep.mubr.f32.mxu0 0.0
    %800 = vmatmul.mubr.f32.gmra.mxu0 %v682
    %v801 = vpop.f32.mrf.mxu0
    %v802 = vadd.f32 %v669, %v801
    %v803 = vpop.f32.mrf.mxu0
    %804 = vmatprep.mubr.f32.mxu0 0.0
    %805 = vmatmul.mubr.f32.gmra.mxu0 %v685
    %v806 = vpop.f32.mrf.mxu0
    %v807 = vadd.f32 %v669, %v806
    %v808 = vpop.f32.mrf.mxu0
    %809 = vmatprep.mubr.f32.mxu0 0.0
    %810 = vmatmul.mubr.f32.gmra.mxu0 %v688
    %v811 = vpop.f32.mrf.mxu0
    %v812 = vadd.f32 %v669, %v811
    %v813 = vpop.f32.mrf.mxu0
    %814 = vmatprep.mubr.f32.mxu0 0.0
    %815 = vmatmul.mubr.f32.gmra.mxu0 %v691
    %v816 = vpop.f32.mrf.mxu0
    %v817 = vadd.f32 %v669, %v816
    %v818 = vpop.f32.mrf.mxu0
    %819 = vmatprep.mubr.f32.mxu0 0.0
    %820 = vmatmul.mubr.f32.gmra.mxu0 %v694
    %v821 = vpop.f32.mrf.mxu0
    %v822 = vadd.f32 %v669, %v821
    %v823 = vpop.f32.mrf.mxu0
    %824 = vmatprep.mubr.f32.mxu0 0.0
    %825 = vmatmul.mubr.f32.gmra.mxu0 %v697
    %v826 = vpop.f32.mrf.mxu0
    %v827 = vadd.f32 %v669, %v826
    %v828 = vpop.f32.mrf.mxu0
    %829 = vmatprep.mubr.f32.mxu0 0.0
    %830 = vmatmul.mubr.f32.gmra.mxu0 %v700
    %v831 = vpop.f32.mrf.mxu0
    %v832 = vadd.f32 %v669, %v831
    %v833 = vpop.f32.mrf.mxu0
    %834 = vmatprep.mubr.f32.mxu0 0.0
    %835 = vmatmul.mubr.f32.gmra.mxu0 %v703
    %v836 = vpop.f32.mrf.mxu0
    %v837 = vadd.f32 %v669, %v836
    %v838 = vpop.f32.mrf.mxu0
    %839 = vmatprep.mubr.f32.mxu0 0.0
    %840 = vmatmul.mubr.f32.gmra.mxu0 %v706
    %v841 = vpop.f32.mrf.mxu0
    %v842 = vadd.f32 %v669, %v841
    %v843 = vpop.f32.mrf.mxu0
    %844 = vmatprep.mubr.f32.mxu0 0.0
    %845 = vmatmul.mubr.f32.gmra.mxu0 %v709
    %v846 = vpop.f32.mrf.mxu0
    %v847 = vadd.f32 %v669, %v846
    %v848 = vpop.f32.mrf.mxu0
    %849 = vmatprep.mubr.f32.mxu0 0.0
    %850 = vmatmul.mubr.f32.gmra.mxu0 %v712
    %v851 = vpop.f32.mrf.mxu0
    %v852 = vadd.f32 %v669, %v851
    %v853 = vpop.f32.mrf.mxu0
    %854 = vmatprep.mubr.f32.mxu0 0.0
    %855 = vmatmul.mubr.f32.gmra.mxu0 %v715
    %v856 = vpop.f32.mrf.mxu0
    %v857 = vadd.f32 %v669, %v856
    %v858 = vpop.f32.mrf.mxu0
    %859 = vmatprep.mubr.f32.mxu0 0.0
    %860 = vmatmul.mubr.f32.gmra.mxu0 %v718
    %v861 = vpop.f32.mrf.mxu0
    %v862 = vadd.f32 %v669, %v861
    %v863 = vpop.f32.mrf.mxu0
    %864 = vdwg.mxu0
    %v865 = vmul.f32 %v787, 0.5
    %v866 = vmul.f32 %v792, 0.5
    %v867 = vmul.f32 %v797, 0.5
    %v868 = vmul.f32 %v802, 0.5
    %v869 = vmul.f32 %v807, 0.5
    %v870 = vmul.f32 %v812, 0.5
    %v871 = vmul.f32 %v817, 0.5
    %v872 = vmul.f32 %v822, 0.5
    %v873 = vmul.f32 %v827, 0.5
    %v874 = vmul.f32 %v832, 0.5
    %v875 = vmul.f32 %v837, 0.5
    %v876 = vmul.f32 %v842, 0.5
    %v877 = vmul.f32 %v847, 0.5
    %v878 = vmul.f32 %v852, 0.5
    %v879 = vmul.f32 %v857, 0.5
    %v880 = vmul.f32 %v862, 0.5
    %v881 = vmul.f32 %v787, 0.70710677
    %v882 = vmul.f32 %v792, 0.70710677
    %v883 = vmul.f32 %v797, 0.70710677
    %v884 = vmul.f32 %v802, 0.70710677
    %v885 = vmul.f32 %v807, 0.70710677
    %v886 = vmul.f32 %v812, 0.70710677
    %v887 = vmul.f32 %v817, 0.70710677
    %v888 = vmul.f32 %v822, 0.70710677
    %v889 = vmul.f32 %v827, 0.70710677
    %v890 = vmul.f32 %v832, 0.70710677
    %v891 = vmul.f32 %v837, 0.70710677
    %v892 = vmul.f32 %v842, 0.70710677
    %v893 = vmul.f32 %v847, 0.70710677
    %v894 = vmul.f32 %v852, 0.70710677
    %v895 = vmul.f32 %v857, 0.70710677
    %v896 = vmul.f32 %v862, 0.70710677
    %v897 = verf.f32.pop %v881
    %v898 = verf.f32.pop %v882
    %v899 = verf.f32.pop %v883
    %v900 = verf.f32.pop %v884
    %v901 = verf.f32.pop %v885
    %v902 = verf.f32.pop %v886
    %v903 = verf.f32.pop %v887
    %v904 = verf.f32.pop %v888
    %v905 = verf.f32.pop %v889
    %v906 = verf.f32.pop %v890
    %v907 = verf.f32.pop %v891
    %v908 = verf.f32.pop %v892
    %v909 = verf.f32.pop %v893
    %v910 = verf.f32.pop %v894
    %v911 = verf.f32.pop %v895
    %v912 = verf.f32.pop %v896
    %v913 = vadd.f32 %v897, 1.0
    %v914 = vadd.f32 %v898, 1.0
    %v915 = vadd.f32 %v899, 1.0
    %v916 = vadd.f32 %v900, 1.0
    %v917 = vadd.f32 %v901, 1.0
    %v918 = vadd.f32 %v902, 1.0
    %v919 = vadd.f32 %v903, 1.0
    %v920 = vadd.f32 %v904, 1.0
    %v921 = vadd.f32 %v905, 1.0
    %v922 = vadd.f32 %v906, 1.0
    %v923 = vadd.f32 %v907, 1.0
    %v924 = vadd.f32 %v908, 1.0
    %v925 = vadd.f32 %v909, 1.0
    %v926 = vadd.f32 %v910, 1.0
    %v927 = vadd.f32 %v911, 1.0
    %v928 = vadd.f32 %v912, 1.0
    %v929 = vmul.f32 %v865, %v913
    %v930 = vmul.f32 %v866, %v914
    %v931 = vmul.f32 %v867, %v915
    %v932 = vmul.f32 %v868, %v916
    %v933 = vmul.f32 %v869, %v917
    %v934 = vmul.f32 %v870, %v918
    %v935 = vmul.f32 %v871, %v919
    %v936 = vmul.f32 %v872, %v920
    %v937 = vmul.f32 %v873, %v921
    %v938 = vmul.f32 %v874, %v922
    %v939 = vmul.f32 %v875, %v923
    %v940 = vmul.f32 %v876, %v924
    %v941 = vmul.f32 %v877, %v925
    %v942 = vmul.f32 %v878, %v926
    %v943 = vmul.f32 %v879, %v927
    %v944 = vmul.f32 %v880, %v928
    %v945 = vld [vmem:[#allocation8] sm:$0xff]
    %v946 = vld [vmem:[#allocation8 + $0x8] sm:$0xff]
    %v947 = vld [vmem:[#allocation8 + $0x10] sm:$0xff]
    %v948 = vld [vmem:[#allocation8 + $0x18] sm:$0xff]
    %v949 = vld [vmem:[#allocation8 + $0x20] sm:$0xff]
    %v950 = vld [vmem:[#allocation8 + $0x28] sm:$0xff]
    %v951 = vld [vmem:[#allocation8 + $0x30] sm:$0xff]
    %v952 = vld [vmem:[#allocation8 + $0x38] sm:$0xff]
    %v953 = vld [vmem:[#allocation8 + $0x40] sm:$0xff]
    %v954 = vld [vmem:[#allocation8 + $0x48] sm:$0xff]
    %v955 = vld [vmem:[#allocation8 + $0x50] sm:$0xff]
    %v956 = vld [vmem:[#allocation8 + $0x58] sm:$0xff]
    %v957 = vld [vmem:[#allocation8 + $0x60] sm:$0xff]
    %v958 = vld [vmem:[#allocation8 + $0x68] sm:$0xff]
    %v959 = vld [vmem:[#allocation8 + $0x70] sm:$0xff]
    %v960 = vld [vmem:[#allocation8 + $0x78] sm:$0xff]
    %v961 = vld [vmem:[%s18] sm:$0x1]
    %v963 = vlaneseq
    %v964 = vshrl.u32 %v963, 7
    %v965 = vsub.s32 0, %v964
    %v966 = vrot.slane %v961, %v965
    %968 = vmatprep.subr.mxu0 0.0
    %969 = vmatpush1.msra.mxu0 %v960
    %970 = vmatprep.subr.mxu0 0.0
    %971 = vmatpush1.msra.mxu0 %v959
    %972 = vmatprep.subr.mxu0 0.0
    %973 = vmatpush1.msra.mxu0 %v958
    %974 = vmatprep.subr.mxu0 0.0
    %975 = vmatpush1.msra.mxu0 %v957
    %976 = vmatprep.subr.mxu0 0.0
    %977 = vmatpush1.msra.mxu0 %v956
    %978 = vmatprep.subr.mxu0 0.0
    %979 = vmatpush1.msra.mxu0 %v955
    %980 = vmatprep.subr.mxu0 0.0
    %981 = vmatpush1.msra.mxu0 %v954
    %982 = vmatprep.subr.mxu0 0.0
    %983 = vmatpush1.msra.mxu0 %v953
    %984 = vmatprep.subr.mxu0 0.0
    %985 = vmatpush1.msra.mxu0 %v952
    %986 = vmatprep.subr.mxu0 0.0
    %987 = vmatpush1.msra.mxu0 %v951
    %988 = vmatprep.subr.mxu0 0.0
    %989 = vmatpush1.msra.mxu0 %v950
    %990 = vmatprep.subr.mxu0 0.0
    %991 = vmatpush1.msra.mxu0 %v949
    %992 = vmatprep.subr.mxu0 0.0
    %993 = vmatpush1.msra.mxu0 %v948
    %994 = vmatprep.subr.mxu0 0.0
    %995 = vmatpush1.msra.mxu0 %v947
    %996 = vmatprep.subr.mxu0 0.0
    %997 = vmatpush1.msra.mxu0 %v946
    %998 = vmatprep.subr.mxu0 0.0
    %999 = vmatpush1.msra.mxu0 %v945
    %1000 = vmatprep.subr.mxu0 0.0
    %1001 = vmatpush2.msra.mxu0 0.0
    %1002 = vmatprep.subr.mxu0 0.0
    %1003 = vmatpush2.msra.mxu0 0.0
    %1004 = vmatprep.subr.mxu0 0.0
    %1005 = vmatpush2.msra.mxu0 0.0
    %1006 = vmatprep.subr.mxu0 0.0
    %1007 = vmatpush2.msra.mxu0 0.0
    %1008 = vmatprep.subr.mxu0 0.0
    %1009 = vmatpush2.msra.mxu0 0.0
    %1010 = vmatprep.subr.mxu0 0.0
    %1011 = vmatpush2.msra.mxu0 0.0
    %1012 = vmatprep.subr.mxu0 0.0
    %1013 = vmatpush2.msra.mxu0 0.0
    %1014 = vmatprep.subr.mxu0 0.0
    %1015 = vmatpush2.msra.mxu0 0.0
    %1016 = vmatprep.subr.mxu0 0.0
    %1017 = vmatpush2.msra.mxu0 0.0
    %1018 = vmatprep.subr.mxu0 0.0
    %1019 = vmatpush2.msra.mxu0 0.0
    %1020 = vmatprep.subr.mxu0 0.0
    %1021 = vmatpush2.msra.mxu0 0.0
    %1022 = vmatprep.subr.mxu0 0.0
    %1023 = vmatpush2.msra.mxu0 0.0
    %1024 = vmatprep.subr.mxu0 0.0
    %1025 = vmatpush2.msra.mxu0 0.0
    %1026 = vmatprep.subr.mxu0 0.0
    %1027 = vmatpush2.msra.mxu0 0.0
    %1028 = vmatprep.subr.mxu0 0.0
    %1029 = vmatpush2.msra.mxu0 0.0
    %1030 = vmatprep.subr.mxu0 0.0
    %1031 = vmatpush2.msra.mxu0 0.0
    %1032 = vmatprep.mubr.f32.mxu0 0.0
    %1033 = vmatmul.mubr.f32.gmra.mxu0 %v929
    %v1034 = vpop.f32.mrf.mxu0
    %v1035 = vadd.f32 %v966, %v1034
    %v1036 = vpop.f32.mrf.mxu0
    %1037 = vmatprep.mubr.f32.mxu0 0.0
    %1038 = vmatmul.mubr.f32.gmra.mxu0 %v930
    %v1039 = vpop.f32.mrf.mxu0
    %v1040 = vadd.f32 %v966, %v1039
    %v1041 = vpop.f32.mrf.mxu0
    %1042 = vmatprep.mubr.f32.mxu0 0.0
    %1043 = vmatmul.mubr.f32.gmra.mxu0 %v931
    %v1044 = vpop.f32.mrf.mxu0
    %v1045 = vadd.f32 %v966, %v1044
    %v1046 = vpop.f32.mrf.mxu0
    %1047 = vmatprep.mubr.f32.mxu0 0.0
    %1048 = vmatmul.mubr.f32.gmra.mxu0 %v932
    %v1049 = vpop.f32.mrf.mxu0
    %v1050 = vadd.f32 %v966, %v1049
    %v1051 = vpop.f32.mrf.mxu0
    %1052 = vmatprep.mubr.f32.mxu0 0.0
    %1053 = vmatmul.mubr.f32.gmra.mxu0 %v933
    %v1054 = vpop.f32.mrf.mxu0
    %v1055 = vadd.f32 %v966, %v1054
    %v1056 = vpop.f32.mrf.mxu0
    %1057 = vmatprep.mubr.f32.mxu0 0.0
    %1058 = vmatmul.mubr.f32.gmra.mxu0 %v934
    %v1059 = vpop.f32.mrf.mxu0
    %v1060 = vadd.f32 %v966, %v1059
    %v1061 = vpop.f32.mrf.mxu0
    %1062 = vmatprep.mubr.f32.mxu0 0.0
    %1063 = vmatmul.mubr.f32.gmra.mxu0 %v935
    %v1064 = vpop.f32.mrf.mxu0
    %v1065 = vadd.f32 %v966, %v1064
    %v1066 = vpop.f32.mrf.mxu0
    %1067 = vmatprep.mubr.f32.mxu0 0.0
    %1068 = vmatmul.mubr.f32.gmra.mxu0 %v936
    %v1069 = vpop.f32.mrf.mxu0
    %v1070 = vadd.f32 %v966, %v1069
    %v1071 = vpop.f32.mrf.mxu0
    %1072 = vmatprep.mubr.f32.mxu0 0.0
    %1073 = vmatmul.mubr.f32.gmra.mxu0 %v937
    %v1074 = vpop.f32.mrf.mxu0
    %v1075 = vadd.f32 %v966, %v1074
    %v1076 = vpop.f32.mrf.mxu0
    %1077 = vmatprep.mubr.f32.mxu0 0.0
    %1078 = vmatmul.mubr.f32.gmra.mxu0 %v938
    %v1079 = vpop.f32.mrf.mxu0
    %v1080 = vadd.f32 %v966, %v1079
    %v1081 = vpop.f32.mrf.mxu0
    %1082 = vmatprep.mubr.f32.mxu0 0.0
    %1083 = vmatmul.mubr.f32.gmra.mxu0 %v939
    %v1084 = vpop.f32.mrf.mxu0
    %v1085 = vadd.f32 %v966, %v1084
    %v1086 = vpop.f32.mrf.mxu0
    %1087 = vmatprep.mubr.f32.mxu0 0.0
    %1088 = vmatmul.mubr.f32.gmra.mxu0 %v940
    %v1089 = vpop.f32.mrf.mxu0
    %v1090 = vadd.f32 %v966, %v1089
    %v1091 = vpop.f32.mrf.mxu0
    %1092 = vmatprep.mubr.f32.mxu0 0.0
    %1093 = vmatmul.mubr.f32.gmra.mxu0 %v941
    %v1094 = vpop.f32.mrf.mxu0
    %v1095 = vadd.f32 %v966, %v1094
    %v1096 = vpop.f32.mrf.mxu0
    %1097 = vmatprep.mubr.f32.mxu0 0.0
    %1098 = vmatmul.mubr.f32.gmra.mxu0 %v942
    %v1099 = vpop.f32.mrf.mxu0
    %v1100 = vadd.f32 %v966, %v1099
    %v1101 = vpop.f32.mrf.mxu0
    %1102 = vmatprep.mubr.f32.mxu0 0.0
    %1103 = vmatmul.mubr.f32.gmra.mxu0 %v943
    %v1104 = vpop.f32.mrf.mxu0
    %v1105 = vadd.f32 %v966, %v1104
    %v1106 = vpop.f32.mrf.mxu0
    %1107 = vmatprep.mubr.f32.mxu0 0.0
    %1108 = vmatmul.mubr.f32.gmra.mxu0 %v944
    %v1109 = vpop.f32.mrf.mxu0
    %v1110 = vadd.f32 %v966, %v1109
    %v1111 = vpop.f32.mrf.mxu0
    %1112 = vdwg.mxu0
    %v1113 = vmul.f32 %v1035, 0.5
    %v1114 = vmul.f32 %v1040, 0.5
    %v1115 = vmul.f32 %v1045, 0.5
    %v1116 = vmul.f32 %v1050, 0.5
    %v1117 = vmul.f32 %v1055, 0.5
    %v1118 = vmul.f32 %v1060, 0.5
    %v1119 = vmul.f32 %v1065, 0.5
    %v1120 = vmul.f32 %v1070, 0.5
    %v1121 = vmul.f32 %v1075, 0.5
    %v1122 = vmul.f32 %v1080, 0.5
    %v1123 = vmul.f32 %v1085, 0.5
    %v1124 = vmul.f32 %v1090, 0.5
    %v1125 = vmul.f32 %v1095, 0.5
    %v1126 = vmul.f32 %v1100, 0.5
    %v1127 = vmul.f32 %v1105, 0.5
    %v1128 = vmul.f32 %v1110, 0.5
    %v1129 = vmul.f32 %v1035, 0.70710677
    %v1130 = vmul.f32 %v1040, 0.70710677
    %v1131 = vmul.f32 %v1045, 0.70710677
    %v1132 = vmul.f32 %v1050, 0.70710677
    %v1133 = vmul.f32 %v1055, 0.70710677
    %v1134 = vmul.f32 %v1060, 0.70710677
    %v1135 = vmul.f32 %v1065, 0.70710677
    %v1136 = vmul.f32 %v1070, 0.70710677
    %v1137 = vmul.f32 %v1075, 0.70710677
    %v1138 = vmul.f32 %v1080, 0.70710677
    %v1139 = vmul.f32 %v1085, 0.70710677
    %v1140 = vmul.f32 %v1090, 0.70710677
    %v1141 = vmul.f32 %v1095, 0.70710677
    %v1142 = vmul.f32 %v1100, 0.70710677
    %v1143 = vmul.f32 %v1105, 0.70710677
    %v1144 = vmul.f32 %v1110, 0.70710677
    %v1145 = verf.f32.pop %v1129
    %v1146 = verf.f32.pop %v1130
    %v1147 = verf.f32.pop %v1131
    %v1148 = verf.f32.pop %v1132
    %v1149 = verf.f32.pop %v1133
    %v1150 = verf.f32.pop %v1134
    %v1151 = verf.f32.pop %v1135
    %v1152 = verf.f32.pop %v1136
    %v1153 = verf.f32.pop %v1137
    %v1154 = verf.f32.pop %v1138
    %v1155 = verf.f32.pop %v1139
    %v1156 = verf.f32.pop %v1140
    %v1157 = verf.f32.pop %v1141
    %v1158 = verf.f32.pop %v1142
    %v1159 = verf.f32.pop %v1143
    %v1160 = verf.f32.pop %v1144
    %v1161 = vadd.f32 %v1145, 1.0
    %v1162 = vadd.f32 %v1146, 1.0
    %v1163 = vadd.f32 %v1147, 1.0
    %v1164 = vadd.f32 %v1148, 1.0
    %v1165 = vadd.f32 %v1149, 1.0
    %v1166 = vadd.f32 %v1150, 1.0
    %v1167 = vadd.f32 %v1151, 1.0
    %v1168 = vadd.f32 %v1152, 1.0
    %v1169 = vadd.f32 %v1153, 1.0
    %v1170 = vadd.f32 %v1154, 1.0
    %v1171 = vadd.f32 %v1155, 1.0
    %v1172 = vadd.f32 %v1156, 1.0
    %v1173 = vadd.f32 %v1157, 1.0
    %v1174 = vadd.f32 %v1158, 1.0
    %v1175 = vadd.f32 %v1159, 1.0
    %v1176 = vadd.f32 %v1160, 1.0
    %v1177 = vmul.f32 %v1113, %v1161
    %v1178 = vmul.f32 %v1114, %v1162
    %v1179 = vmul.f32 %v1115, %v1163
    %v1180 = vmul.f32 %v1116, %v1164
    %v1181 = vmul.f32 %v1117, %v1165
    %v1182 = vmul.f32 %v1118, %v1166
    %v1183 = vmul.f32 %v1119, %v1167
    %v1184 = vmul.f32 %v1120, %v1168
    %v1185 = vmul.f32 %v1121, %v1169
    %v1186 = vmul.f32 %v1122, %v1170
    %v1187 = vmul.f32 %v1123, %v1171
    %v1188 = vmul.f32 %v1124, %v1172
    %v1189 = vmul.f32 %v1125, %v1173
    %v1190 = vmul.f32 %v1126, %v1174
    %v1191 = vmul.f32 %v1127, %v1175
    %v1192 = vmul.f32 %v1128, %v1176
    %v1193 = vld [vmem:[#allocation10] sm:$0xff]
    %v1194 = vld [vmem:[#allocation10 + $0x8] sm:$0xff]
    %v1195 = vld [vmem:[#allocation10 + $0x10] sm:$0xff]
    %v1196 = vld [vmem:[#allocation10 + $0x18] sm:$0xff]
    %v1197 = vld [vmem:[#allocation10 + $0x20] sm:$0xff]
    %v1198 = vld [vmem:[#allocation10 + $0x28] sm:$0xff]
    %v1199 = vld [vmem:[#allocation10 + $0x30] sm:$0xff]
    %v1200 = vld [vmem:[#allocation10 + $0x38] sm:$0xff]
    %v1201 = vld [vmem:[#allocation10 + $0x40] sm:$0xff]
    %v1202 = vld [vmem:[#allocation10 + $0x48] sm:$0xff]
    %v1203 = vld [vmem:[#allocation10 + $0x50] sm:$0xff]
    %v1204 = vld [vmem:[#allocation10 + $0x58] sm:$0xff]
    %v1205 = vld [vmem:[#allocation10 + $0x60] sm:$0xff]
    %v1206 = vld [vmem:[#allocation10 + $0x68] sm:$0xff]
    %v1207 = vld [vmem:[#allocation10 + $0x70] sm:$0xff]
    %v1208 = vld [vmem:[#allocation10 + $0x78] sm:$0xff]
    %v1209 = vld [vmem:[%s19] sm:$0x1]
    %v1211 = vlaneseq
    %v1212 = vshrl.u32 %v1211, 7
    %v1213 = vsub.s32 0, %v1212
    %v1214 = vrot.slane %v1209, %v1213
    %1216 = vmatprep.subr.mxu0 0.0
    %1217 = vmatpush1.msra.mxu0 %v1208
    %1218 = vmatprep.subr.mxu0 0.0
    %1219 = vmatpush1.msra.mxu0 %v1207
    %1220 = vmatprep.subr.mxu0 0.0
    %1221 = vmatpush1.msra.mxu0 %v1206
    %1222 = vmatprep.subr.mxu0 0.0
    %1223 = vmatpush1.msra.mxu0 %v1205
    %1224 = vmatprep.subr.mxu0 0.0
    %1225 = vmatpush1.msra.mxu0 %v1204
    %1226 = vmatprep.subr.mxu0 0.0
    %1227 = vmatpush1.msra.mxu0 %v1203
    %1228 = vmatprep.subr.mxu0 0.0
    %1229 = vmatpush1.msra.mxu0 %v1202
    %1230 = vmatprep.subr.mxu0 0.0
    %1231 = vmatpush1.msra.mxu0 %v1201
    %1232 = vmatprep.subr.mxu0 0.0
    %1233 = vmatpush1.msra.mxu0 %v1200
    %1234 = vmatprep.subr.mxu0 0.0
    %1235 = vmatpush1.msra.mxu0 %v1199
    %1236 = vmatprep.subr.mxu0 0.0
    %1237 = vmatpush1.msra.mxu0 %v1198
    %1238 = vmatprep.subr.mxu0 0.0
    %1239 = vmatpush1.msra.mxu0 %v1197
    %1240 = vmatprep.subr.mxu0 0.0
    %1241 = vmatpush1.msra.mxu0 %v1196
    %1242 = vmatprep.subr.mxu0 0.0
    %1243 = vmatpush1.msra.mxu0 %v1195
    %1244 = vmatprep.subr.mxu0 0.0
    %1245 = vmatpush1.msra.mxu0 %v1194
    %1246 = vmatprep.subr.mxu0 0.0
    %1247 = vmatpush1.msra.mxu0 %v1193
    %1248 = vmatprep.subr.mxu0 0.0
    %1249 = vmatpush2.msra.mxu0 0.0
    %1250 = vmatprep.subr.mxu0 0.0
    %1251 = vmatpush2.msra.mxu0 0.0
    %1252 = vmatprep.subr.mxu0 0.0
    %1253 = vmatpush2.msra.mxu0 0.0
    %1254 = vmatprep.subr.mxu0 0.0
    %1255 = vmatpush2.msra.mxu0 0.0
    %1256 = vmatprep.subr.mxu0 0.0
    %1257 = vmatpush2.msra.mxu0 0.0
    %1258 = vmatprep.subr.mxu0 0.0
    %1259 = vmatpush2.msra.mxu0 0.0
    %1260 = vmatprep.subr.mxu0 0.0
    %1261 = vmatpush2.msra.mxu0 0.0
    %1262 = vmatprep.subr.mxu0 0.0
    %1263 = vmatpush2.msra.mxu0 0.0
    %1264 = vmatprep.subr.mxu0 0.0
    %1265 = vmatpush2.msra.mxu0 0.0
    %1266 = vmatprep.subr.mxu0 0.0
    %1267 = vmatpush2.msra.mxu0 0.0
    %1268 = vmatprep.subr.mxu0 0.0
    %1269 = vmatpush2.msra.mxu0 0.0
    %1270 = vmatprep.subr.mxu0 0.0
    %1271 = vmatpush2.msra.mxu0 0.0
    %1272 = vmatprep.subr.mxu0 0.0
    %1273 = vmatpush2.msra.mxu0 0.0
    %1274 = vmatprep.subr.mxu0 0.0
    %1275 = vmatpush2.msra.mxu0 0.0
    %1276 = vmatprep.subr.mxu0 0.0
    %1277 = vmatpush2.msra.mxu0 0.0
    %1278 = vmatprep.subr.mxu0 0.0
    %1279 = vmatpush2.msra.mxu0 0.0
    %1280 = vmatprep.mubr.f32.mxu0 0.0
    %1281 = vmatmul.mubr.f32.gmra.mxu0 %v1177
    %v1282 = vpop.f32.mrf.mxu0
    %v1283 = vadd.f32 %v1214, %v1282
    %v1284 = vpop.f32.mrf.mxu0
    %1285 = vmatprep.mubr.f32.mxu0 0.0
    %1286 = vmatmul.mubr.f32.gmra.mxu0 %v1178
    %v1287 = vpop.f32.mrf.mxu0
    %v1288 = vadd.f32 %v1214, %v1287
    %v1289 = vpop.f32.mrf.mxu0
    %1290 = vmatprep.mubr.f32.mxu0 0.0
    %1291 = vmatmul.mubr.f32.gmra.mxu0 %v1179
    %v1292 = vpop.f32.mrf.mxu0
    %v1293 = vadd.f32 %v1214, %v1292
    %v1294 = vpop.f32.mrf.mxu0
    %1295 = vmatprep.mubr.f32.mxu0 0.0
    %1296 = vmatmul.mubr.f32.gmra.mxu0 %v1180
    %v1297 = vpop.f32.mrf.mxu0
    %v1298 = vadd.f32 %v1214, %v1297
    %v1299 = vpop.f32.mrf.mxu0
    %1300 = vmatprep.mubr.f32.mxu0 0.0
    %1301 = vmatmul.mubr.f32.gmra.mxu0 %v1181
    %v1302 = vpop.f32.mrf.mxu0
    %v1303 = vadd.f32 %v1214, %v1302
    %v1304 = vpop.f32.mrf.mxu0
    %1305 = vmatprep.mubr.f32.mxu0 0.0
    %1306 = vmatmul.mubr.f32.gmra.mxu0 %v1182
    %v1307 = vpop.f32.mrf.mxu0
    %v1308 = vadd.f32 %v1214, %v1307
    %v1309 = vpop.f32.mrf.mxu0
    %1310 = vmatprep.mubr.f32.mxu0 0.0
    %1311 = vmatmul.mubr.f32.gmra.mxu0 %v1183
    %v1312 = vpop.f32.mrf.mxu0
    %v1313 = vadd.f32 %v1214, %v1312
    %v1314 = vpop.f32.mrf.mxu0
    %1315 = vmatprep.mubr.f32.mxu0 0.0
    %1316 = vmatmul.mubr.f32.gmra.mxu0 %v1184
    %v1317 = vpop.f32.mrf.mxu0
    %v1318 = vadd.f32 %v1214, %v1317
    %v1319 = vpop.f32.mrf.mxu0
    %1320 = vmatprep.mubr.f32.mxu0 0.0
    %1321 = vmatmul.mubr.f32.gmra.mxu0 %v1185
    %v1322 = vpop.f32.mrf.mxu0
    %v1323 = vadd.f32 %v1214, %v1322
    %v1324 = vpop.f32.mrf.mxu0
    %1325 = vmatprep.mubr.f32.mxu0 0.0
    %1326 = vmatmul.mubr.f32.gmra.mxu0 %v1186
    %v1327 = vpop.f32.mrf.mxu0
    %v1328 = vadd.f32 %v1214, %v1327
    %v1329 = vpop.f32.mrf.mxu0
    %1330 = vmatprep.mubr.f32.mxu0 0.0
    %1331 = vmatmul.mubr.f32.gmra.mxu0 %v1187
    %v1332 = vpop.f32.mrf.mxu0
    %v1333 = vadd.f32 %v1214, %v1332
    %v1334 = vpop.f32.mrf.mxu0
    %1335 = vmatprep.mubr.f32.mxu0 0.0
    %1336 = vmatmul.mubr.f32.gmra.mxu0 %v1188
    %v1337 = vpop.f32.mrf.mxu0
    %v1338 = vadd.f32 %v1214, %v1337
    %v1339 = vpop.f32.mrf.mxu0
    %1340 = vmatprep.mubr.f32.mxu0 0.0
    %1341 = vmatmul.mubr.f32.gmra.mxu0 %v1189
    %v1342 = vpop.f32.mrf.mxu0
    %v1343 = vadd.f32 %v1214, %v1342
    %v1344 = vpop.f32.mrf.mxu0
    %1345 = vmatprep.mubr.f32.mxu0 0.0
    %1346 = vmatmul.mubr.f32.gmra.mxu0 %v1190
    %v1347 = vpop.f32.mrf.mxu0
    %v1348 = vadd.f32 %v1214, %v1347
    %v1349 = vpop.f32.mrf.mxu0
    %1350 = vmatprep.mubr.f32.mxu0 0.0
    %1351 = vmatmul.mubr.f32.gmra.mxu0 %v1191
    %v1352 = vpop.f32.mrf.mxu0
    %v1353 = vadd.f32 %v1214, %v1352
    %v1354 = vpop.f32.mrf.mxu0
    %1355 = vmatprep.mubr.f32.mxu0 0.0
    %1356 = vmatmul.mubr.f32.gmra.mxu0 %v1192
    %v1357 = vpop.f32.mrf.mxu0
    %v1358 = vadd.f32 %v1214, %v1357
    %v1359 = vpop.f32.mrf.mxu0
    %1360 = vdwg.mxu0
    %v1361 = vmul.f32 %v1283, 0.5
    %v1362 = vmul.f32 %v1288, 0.5
    %v1363 = vmul.f32 %v1293, 0.5
    %v1364 = vmul.f32 %v1298, 0.5
    %v1365 = vmul.f32 %v1303, 0.5
    %v1366 = vmul.f32 %v1308, 0.5
    %v1367 = vmul.f32 %v1313, 0.5
    %v1368 = vmul.f32 %v1318, 0.5
    %v1369 = vmul.f32 %v1323, 0.5
    %v1370 = vmul.f32 %v1328, 0.5
    %v1371 = vmul.f32 %v1333, 0.5
    %v1372 = vmul.f32 %v1338, 0.5
    %v1373 = vmul.f32 %v1343, 0.5
    %v1374 = vmul.f32 %v1348, 0.5
    %v1375 = vmul.f32 %v1353, 0.5
    %v1376 = vmul.f32 %v1358, 0.5
    %v1377 = vmul.f32 %v1283, 0.70710677
    %v1378 = vmul.f32 %v1288, 0.70710677
    %v1379 = vmul.f32 %v1293, 0.70710677
    %v1380 = vmul.f32 %v1298, 0.70710677
    %v1381 = vmul.f32 %v1303, 0.70710677
    %v1382 = vmul.f32 %v1308, 0.70710677
    %v1383 = vmul.f32 %v1313, 0.70710677
    %v1384 = vmul.f32 %v1318, 0.70710677
    %v1385 = vmul.f32 %v1323, 0.70710677
    %v1386 = vmul.f32 %v1328, 0.70710677
    %v1387 = vmul.f32 %v1333, 0.70710677
    %v1388 = vmul.f32 %v1338, 0.70710677
    %v1389 = vmul.f32 %v1343, 0.70710677
    %v1390 = vmul.f32 %v1348, 0.70710677
    %v1391 = vmul.f32 %v1353, 0.70710677
    %v1392 = vmul.f32 %v1358, 0.70710677
    %v1393 = verf.f32.pop %v1377
    %v1394 = verf.f32.pop %v1378
    %v1395 = verf.f32.pop %v1379
    %v1396 = verf.f32.pop %v1380
    %v1397 = verf.f32.pop %v1381
    %v1398 = verf.f32.pop %v1382
    %v1399 = verf.f32.pop %v1383
    %v1400 = verf.f32.pop %v1384
    %v1401 = verf.f32.pop %v1385
    %v1402 = verf.f32.pop %v1386
    %v1403 = verf.f32.pop %v1387
    %v1404 = verf.f32.pop %v1388
    %v1405 = verf.f32.pop %v1389
    %v1406 = verf.f32.pop %v1390
    %v1407 = verf.f32.pop %v1391
    %v1408 = verf.f32.pop %v1392
    %v1409 = vadd.f32 %v1393, 1.0
    %v1410 = vadd.f32 %v1394, 1.0
    %v1411 = vadd.f32 %v1395, 1.0
    %v1412 = vadd.f32 %v1396, 1.0
    %v1413 = vadd.f32 %v1397, 1.0
    %v1414 = vadd.f32 %v1398, 1.0
    %v1415 = vadd.f32 %v1399, 1.0
    %v1416 = vadd.f32 %v1400, 1.0
    %v1417 = vadd.f32 %v1401, 1.0
    %v1418 = vadd.f32 %v1402, 1.0
    %v1419 = vadd.f32 %v1403, 1.0
    %v1420 = vadd.f32 %v1404, 1.0
    %v1421 = vadd.f32 %v1405, 1.0
    %v1422 = vadd.f32 %v1406, 1.0
    %v1423 = vadd.f32 %v1407, 1.0
    %v1424 = vadd.f32 %v1408, 1.0
    %v1425 = vmul.f32 %v1361, %v1409
    %v1426 = vmul.f32 %v1362, %v1410
    %v1427 = vmul.f32 %v1363, %v1411
    %v1428 = vmul.f32 %v1364, %v1412
    %v1429 = vmul.f32 %v1365, %v1413
    %v1430 = vmul.f32 %v1366, %v1414
    %v1431 = vmul.f32 %v1367, %v1415
    %v1432 = vmul.f32 %v1368, %v1416
    %v1433 = vmul.f32 %v1369, %v1417
    %v1434 = vmul.f32 %v1370, %v1418
    %v1435 = vmul.f32 %v1371, %v1419
    %v1436 = vmul.f32 %v1372, %v1420
    %v1437 = vmul.f32 %v1373, %v1421
    %v1438 = vmul.f32 %v1374, %v1422
    %v1439 = vmul.f32 %v1375, %v1423
    %v1440 = vmul.f32 %v1376, %v1424
    %v1441 = vld [vmem:[#allocation11] sm:$0xff]
    %v1442 = vld [vmem:[#allocation11 + $0x8] sm:$0xff]
    %v1443 = vld [vmem:[#allocation11 + $0x10] sm:$0xff]
    %v1444 = vld [vmem:[#allocation11 + $0x18] sm:$0xff]
    %v1445 = vld [vmem:[#allocation11 + $0x20] sm:$0xff]
    %v1446 = vld [vmem:[#allocation11 + $0x28] sm:$0xff]
    %v1447 = vld [vmem:[#allocation11 + $0x30] sm:$0xff]
    %v1448 = vld [vmem:[#allocation11 + $0x38] sm:$0xff]
    %v1449 = vld [vmem:[#allocation11 + $0x40] sm:$0xff]
    %v1450 = vld [vmem:[#allocation11 + $0x48] sm:$0xff]
    %v1451 = vld [vmem:[#allocation11 + $0x50] sm:$0xff]
    %v1452 = vld [vmem:[#allocation11 + $0x58] sm:$0xff]
    %v1453 = vld [vmem:[#allocation11 + $0x60] sm:$0xff]
    %v1454 = vld [vmem:[#allocation11 + $0x68] sm:$0xff]
    %v1455 = vld [vmem:[#allocation11 + $0x70] sm:$0xff]
    %v1456 = vld [vmem:[#allocation11 + $0x78] sm:$0xff]
    %v1457 = vld [vmem:[%s20] sm:$0x1]
    %v1459 = vlaneseq
    %v1460 = vshrl.u32 %v1459, 7
    %v1461 = vsub.s32 0, %v1460
    %v1462 = vrot.slane %v1457, %v1461
    %1464 = vmatprep.subr.mxu0 0.0
    %1465 = vmatpush1.msra.mxu0 %v1456
    %1466 = vmatprep.subr.mxu0 0.0
    %1467 = vmatpush1.msra.mxu0 %v1455
    %1468 = vmatprep.subr.mxu0 0.0
    %1469 = vmatpush1.msra.mxu0 %v1454
    %1470 = vmatprep.subr.mxu0 0.0
    %1471 = vmatpush1.msra.mxu0 %v1453
    %1472 = vmatprep.subr.mxu0 0.0
    %1473 = vmatpush1.msra.mxu0 %v1452
    %1474 = vmatprep.subr.mxu0 0.0
    %1475 = vmatpush1.msra.mxu0 %v1451
    %1476 = vmatprep.subr.mxu0 0.0
    %1477 = vmatpush1.msra.mxu0 %v1450
    %1478 = vmatprep.subr.mxu0 0.0
    %1479 = vmatpush1.msra.mxu0 %v1449
    %1480 = vmatprep.subr.mxu0 0.0
    %1481 = vmatpush1.msra.mxu0 %v1448
    %1482 = vmatprep.subr.mxu0 0.0
    %1483 = vmatpush1.msra.mxu0 %v1447
    %1484 = vmatprep.subr.mxu0 0.0
    %1485 = vmatpush1.msra.mxu0 %v1446
    %1486 = vmatprep.subr.mxu0 0.0
    %1487 = vmatpush1.msra.mxu0 %v1445
    %1488 = vmatprep.subr.mxu0 0.0
    %1489 = vmatpush1.msra.mxu0 %v1444
    %1490 = vmatprep.subr.mxu0 0.0
    %1491 = vmatpush1.msra.mxu0 %v1443
    %1492 = vmatprep.subr.mxu0 0.0
    %1493 = vmatpush1.msra.mxu0 %v1442
    %1494 = vmatprep.subr.mxu0 0.0
    %1495 = vmatpush1.msra.mxu0 %v1441
    %1496 = vmatprep.subr.mxu0 0.0
    %1497 = vmatpush2.msra.mxu0 0.0
    %1498 = vmatprep.subr.mxu0 0.0
    %1499 = vmatpush2.msra.mxu0 0.0
    %1500 = vmatprep.subr.mxu0 0.0
    %1501 = vmatpush2.msra.mxu0 0.0
    %1502 = vmatprep.subr.mxu0 0.0
    %1503 = vmatpush2.msra.mxu0 0.0
    %1504 = vmatprep.subr.mxu0 0.0
    %1505 = vmatpush2.msra.mxu0 0.0
    %1506 = vmatprep.subr.mxu0 0.0
    %1507 = vmatpush2.msra.mxu0 0.0
    %1508 = vmatprep.subr.mxu0 0.0
    %1509 = vmatpush2.msra.mxu0 0.0
    %1510 = vmatprep.subr.mxu0 0.0
    %1511 = vmatpush2.msra.mxu0 0.0
    %1512 = vmatprep.subr.mxu0 0.0
    %1513 = vmatpush2.msra.mxu0 0.0
    %1514 = vmatprep.subr.mxu0 0.0
    %1515 = vmatpush2.msra.mxu0 0.0
    %1516 = vmatprep.subr.mxu0 0.0
    %1517 = vmatpush2.msra.mxu0 0.0
    %1518 = vmatprep.subr.mxu0 0.0
    %1519 = vmatpush2.msra.mxu0 0.0
    %1520 = vmatprep.subr.mxu0 0.0
    %1521 = vmatpush2.msra.mxu0 0.0
    %1522 = vmatprep.subr.mxu0 0.0
    %1523 = vmatpush2.msra.mxu0 0.0
    %1524 = vmatprep.subr.mxu0 0.0
    %1525 = vmatpush2.msra.mxu0 0.0
    %1526 = vmatprep.subr.mxu0 0.0
    %1527 = vmatpush2.msra.mxu0 0.0
    %1528 = vmatprep.mubr.f32.mxu0 0.0
    %1529 = vmatmul.mubr.f32.gmra.mxu0 %v1425
    %v1530 = vpop.f32.mrf.mxu0
    %v1531 = vadd.f32 %v1462, %v1530
    %v1532 = vpop.f32.mrf.mxu0
    %1533 = vmatprep.mubr.f32.mxu0 0.0
    %1534 = vmatmul.mubr.f32.gmra.mxu0 %v1426
    %v1535 = vpop.f32.mrf.mxu0
    %v1536 = vadd.f32 %v1462, %v1535
    %v1537 = vpop.f32.mrf.mxu0
    %1538 = vmatprep.mubr.f32.mxu0 0.0
    %1539 = vmatmul.mubr.f32.gmra.mxu0 %v1427
    %v1540 = vpop.f32.mrf.mxu0
    %v1541 = vadd.f32 %v1462, %v1540
    %v1542 = vpop.f32.mrf.mxu0
    %1543 = vmatprep.mubr.f32.mxu0 0.0
    %1544 = vmatmul.mubr.f32.gmra.mxu0 %v1428
    %v1545 = vpop.f32.mrf.mxu0
    %v1546 = vadd.f32 %v1462, %v1545
    %v1547 = vpop.f32.mrf.mxu0
    %1548 = vmatprep.mubr.f32.mxu0 0.0
    %1549 = vmatmul.mubr.f32.gmra.mxu0 %v1429
    %v1550 = vpop.f32.mrf.mxu0
    %v1551 = vadd.f32 %v1462, %v1550
    %v1552 = vpop.f32.mrf.mxu0
    %1553 = vmatprep.mubr.f32.mxu0 0.0
    %1554 = vmatmul.mubr.f32.gmra.mxu0 %v1430
    %v1555 = vpop.f32.mrf.mxu0
    %v1556 = vadd.f32 %v1462, %v1555
    %v1557 = vpop.f32.mrf.mxu0
    %1558 = vmatprep.mubr.f32.mxu0 0.0
    %1559 = vmatmul.mubr.f32.gmra.mxu0 %v1431
    %v1560 = vpop.f32.mrf.mxu0
    %v1561 = vadd.f32 %v1462, %v1560
    %v1562 = vpop.f32.mrf.mxu0
    %1563 = vmatprep.mubr.f32.mxu0 0.0
    %1564 = vmatmul.mubr.f32.gmra.mxu0 %v1432
    %v1565 = vpop.f32.mrf.mxu0
    %v1566 = vadd.f32 %v1462, %v1565
    %v1567 = vpop.f32.mrf.mxu0
    %1568 = vmatprep.mubr.f32.mxu0 0.0
    %1569 = vmatmul.mubr.f32.gmra.mxu0 %v1433
    %v1570 = vpop.f32.mrf.mxu0
    %v1571 = vadd.f32 %v1462, %v1570
    %v1572 = vpop.f32.mrf.mxu0
    %1573 = vmatprep.mubr.f32.mxu0 0.0
    %1574 = vmatmul.mubr.f32.gmra.mxu0 %v1434
    %v1575 = vpop.f32.mrf.mxu0
    %v1576 = vadd.f32 %v1462, %v1575
    %v1577 = vpop.f32.mrf.mxu0
    %1578 = vmatprep.mubr.f32.mxu0 0.0
    %1579 = vmatmul.mubr.f32.gmra.mxu0 %v1435
    %v1580 = vpop.f32.mrf.mxu0
    %v1581 = vadd.f32 %v1462, %v1580
    %v1582 = vpop.f32.mrf.mxu0
    %1583 = vmatprep.mubr.f32.mxu0 0.0
    %1584 = vmatmul.mubr.f32.gmra.mxu0 %v1436
    %v1585 = vpop.f32.mrf.mxu0
    %v1586 = vadd.f32 %v1462, %v1585
    %v1587 = vpop.f32.mrf.mxu0
    %1588 = vmatprep.mubr.f32.mxu0 0.0
    %1589 = vmatmul.mubr.f32.gmra.mxu0 %v1437
    %v1590 = vpop.f32.mrf.mxu0
    %v1591 = vadd.f32 %v1462, %v1590
    %v1592 = vpop.f32.mrf.mxu0
    %1593 = vmatprep.mubr.f32.mxu0 0.0
    %1594 = vmatmul.mubr.f32.gmra.mxu0 %v1438
    %v1595 = vpop.f32.mrf.mxu0
    %v1596 = vadd.f32 %v1462, %v1595
    %v1597 = vpop.f32.mrf.mxu0
    %1598 = vmatprep.mubr.f32.mxu0 0.0
    %1599 = vmatmul.mubr.f32.gmra.mxu0 %v1439
    %v1600 = vpop.f32.mrf.mxu0
    %v1601 = vadd.f32 %v1462, %v1600
    %v1602 = vpop.f32.mrf.mxu0
    %1603 = vmatprep.mubr.f32.mxu0 0.0
    %1604 = vmatmul.mubr.f32.gmra.mxu0 %v1440
    %v1605 = vpop.f32.mrf.mxu0
    %v1606 = vadd.f32 %v1462, %v1605
    %v1607 = vpop.f32.mrf.mxu0
    %1608 = vdwg.mxu0
    %v1609 = vmul.f32 %v1531, 0.5
    %v1610 = vmul.f32 %v1536, 0.5
    %v1611 = vmul.f32 %v1541, 0.5
    %v1612 = vmul.f32 %v1546, 0.5
    %v1613 = vmul.f32 %v1551, 0.5
    %v1614 = vmul.f32 %v1556, 0.5
    %v1615 = vmul.f32 %v1561, 0.5
    %v1616 = vmul.f32 %v1566, 0.5
    %v1617 = vmul.f32 %v1571, 0.5
    %v1618 = vmul.f32 %v1576, 0.5
    %v1619 = vmul.f32 %v1581, 0.5
    %v1620 = vmul.f32 %v1586, 0.5
    %v1621 = vmul.f32 %v1591, 0.5
    %v1622 = vmul.f32 %v1596, 0.5
    %v1623 = vmul.f32 %v1601, 0.5
    %v1624 = vmul.f32 %v1606, 0.5
    %v1625 = vmul.f32 %v1531, 0.70710677
    %v1626 = vmul.f32 %v1536, 0.70710677
    %v1627 = vmul.f32 %v1541, 0.70710677
    %v1628 = vmul.f32 %v1546, 0.70710677
    %v1629 = vmul.f32 %v1551, 0.70710677
    %v1630 = vmul.f32 %v1556, 0.70710677
    %v1631 = vmul.f32 %v1561, 0.70710677
    %v1632 = vmul.f32 %v1566, 0.70710677
    %v1633 = vmul.f32 %v1571, 0.70710677
    %v1634 = vmul.f32 %v1576, 0.70710677
    %v1635 = vmul.f32 %v1581, 0.70710677
    %v1636 = vmul.f32 %v1586, 0.70710677
    %v1637 = vmul.f32 %v1591, 0.70710677
    %v1638 = vmul.f32 %v1596, 0.70710677
    %v1639 = vmul.f32 %v1601, 0.70710677
    %v1640 = vmul.f32 %v1606, 0.70710677
    %v1641 = verf.f32.pop %v1625
    %v1642 = verf.f32.pop %v1626
    %v1643 = verf.f32.pop %v1627
    %v1644 = verf.f32.pop %v1628
    %v1645 = verf.f32.pop %v1629
    %v1646 = verf.f32.pop %v1630
    %v1647 = verf.f32.pop %v1631
    %v1648 = verf.f32.pop %v1632
    %v1649 = verf.f32.pop %v1633
    %v1650 = verf.f32.pop %v1634
    %v1651 = verf.f32.pop %v1635
    %v1652 = verf.f32.pop %v1636
    %v1653 = verf.f32.pop %v1637
    %v1654 = verf.f32.pop %v1638
    %v1655 = verf.f32.pop %v1639
    %v1656 = verf.f32.pop %v1640
    %v1657 = vadd.f32 %v1641, 1.0
    %v1658 = vadd.f32 %v1642, 1.0
    %v1659 = vadd.f32 %v1643, 1.0
    %v1660 = vadd.f32 %v1644, 1.0
    %v1661 = vadd.f32 %v1645, 1.0
    %v1662 = vadd.f32 %v1646, 1.0
    %v1663 = vadd.f32 %v1647, 1.0
    %v1664 = vadd.f32 %v1648, 1.0
    %v1665 = vadd.f32 %v1649, 1.0
    %v1666 = vadd.f32 %v1650, 1.0
    %v1667 = vadd.f32 %v1651, 1.0
    %v1668 = vadd.f32 %v1652, 1.0
    %v1669 = vadd.f32 %v1653, 1.0
    %v1670 = vadd.f32 %v1654, 1.0
    %v1671 = vadd.f32 %v1655, 1.0
    %v1672 = vadd.f32 %v1656, 1.0
    %v1673 = vmul.f32 %v1609, %v1657
    %v1674 = vmul.f32 %v1610, %v1658
    %v1675 = vmul.f32 %v1611, %v1659
    %v1676 = vmul.f32 %v1612, %v1660
    %v1677 = vmul.f32 %v1613, %v1661
    %v1678 = vmul.f32 %v1614, %v1662
    %v1679 = vmul.f32 %v1615, %v1663
    %v1680 = vmul.f32 %v1616, %v1664
    %v1681 = vmul.f32 %v1617, %v1665
    %v1682 = vmul.f32 %v1618, %v1666
    %v1683 = vmul.f32 %v1619, %v1667
    %v1684 = vmul.f32 %v1620, %v1668
    %v1685 = vmul.f32 %v1621, %v1669
    %v1686 = vmul.f32 %v1622, %v1670
    %v1687 = vmul.f32 %v1623, %v1671
    %v1688 = vmul.f32 %v1624, %v1672
    %v1689 = vld [vmem:[#allocation13] sm:$0xff]
    %v1690 = vld [vmem:[#allocation13 + $0x8] sm:$0xff]
    %v1691 = vld [vmem:[#allocation13 + $0x10] sm:$0xff]
    %v1692 = vld [vmem:[#allocation13 + $0x18] sm:$0xff]
    %v1693 = vld [vmem:[#allocation13 + $0x20] sm:$0xff]
    %v1694 = vld [vmem:[#allocation13 + $0x28] sm:$0xff]
    %v1695 = vld [vmem:[#allocation13 + $0x30] sm:$0xff]
    %v1696 = vld [vmem:[#allocation13 + $0x38] sm:$0xff]
    %v1697 = vld [vmem:[#allocation13 + $0x40] sm:$0xff]
    %v1698 = vld [vmem:[#allocation13 + $0x48] sm:$0xff]
    %v1699 = vld [vmem:[#allocation13 + $0x50] sm:$0xff]
    %v1700 = vld [vmem:[#allocation13 + $0x58] sm:$0xff]
    %v1701 = vld [vmem:[#allocation13 + $0x60] sm:$0xff]
    %v1702 = vld [vmem:[#allocation13 + $0x68] sm:$0xff]
    %v1703 = vld [vmem:[#allocation13 + $0x70] sm:$0xff]
    %v1704 = vld [vmem:[#allocation13 + $0x78] sm:$0xff]
    %v1705 = vld [vmem:[%s21] sm:$0x1]
    %v1707 = vlaneseq
    %v1708 = vshrl.u32 %v1707, 7
    %v1709 = vsub.s32 0, %v1708
    %v1710 = vrot.slane %v1705, %v1709
    %1712 = vmatprep.subr.mxu0 0.0
    %1713 = vmatpush1.msra.mxu0 %v1704
    %1714 = vmatprep.subr.mxu0 0.0
    %1715 = vmatpush1.msra.mxu0 %v1703
    %1716 = vmatprep.subr.mxu0 0.0
    %1717 = vmatpush1.msra.mxu0 %v1702
    %1718 = vmatprep.subr.mxu0 0.0
    %1719 = vmatpush1.msra.mxu0 %v1701
    %1720 = vmatprep.subr.mxu0 0.0
    %1721 = vmatpush1.msra.mxu0 %v1700
    %1722 = vmatprep.subr.mxu0 0.0
    %1723 = vmatpush1.msra.mxu0 %v1699
    %1724 = vmatprep.subr.mxu0 0.0
    %1725 = vmatpush1.msra.mxu0 %v1698
    %1726 = vmatprep.subr.mxu0 0.0
    %1727 = vmatpush1.msra.mxu0 %v1697
    %1728 = vmatprep.subr.mxu0 0.0
    %1729 = vmatpush1.msra.mxu0 %v1696
    %1730 = vmatprep.subr.mxu0 0.0
    %1731 = vmatpush1.msra.mxu0 %v1695
    %1732 = vmatprep.subr.mxu0 0.0
    %1733 = vmatpush1.msra.mxu0 %v1694
    %1734 = vmatprep.subr.mxu0 0.0
    %1735 = vmatpush1.msra.mxu0 %v1693
    %1736 = vmatprep.subr.mxu0 0.0
    %1737 = vmatpush1.msra.mxu0 %v1692
    %1738 = vmatprep.subr.mxu0 0.0
    %1739 = vmatpush1.msra.mxu0 %v1691
    %1740 = vmatprep.subr.mxu0 0.0
    %1741 = vmatpush1.msra.mxu0 %v1690
    %1742 = vmatprep.subr.mxu0 0.0
    %1743 = vmatpush1.msra.mxu0 %v1689
    %1744 = vmatprep.subr.mxu0 0.0
    %1745 = vmatpush2.msra.mxu0 0.0
    %1746 = vmatprep.subr.mxu0 0.0
    %1747 = vmatpush2.msra.mxu0 0.0
    %1748 = vmatprep.subr.mxu0 0.0
    %1749 = vmatpush2.msra.mxu0 0.0
    %1750 = vmatprep.subr.mxu0 0.0
    %1751 = vmatpush2.msra.mxu0 0.0
    %1752 = vmatprep.subr.mxu0 0.0
    %1753 = vmatpush2.msra.mxu0 0.0
    %1754 = vmatprep.subr.mxu0 0.0
    %1755 = vmatpush2.msra.mxu0 0.0
    %1756 = vmatprep.subr.mxu0 0.0
    %1757 = vmatpush2.msra.mxu0 0.0
    %1758 = vmatprep.subr.mxu0 0.0
    %1759 = vmatpush2.msra.mxu0 0.0
    %1760 = vmatprep.subr.mxu0 0.0
    %1761 = vmatpush2.msra.mxu0 0.0
    %1762 = vmatprep.subr.mxu0 0.0
    %1763 = vmatpush2.msra.mxu0 0.0
    %1764 = vmatprep.subr.mxu0 0.0
    %1765 = vmatpush2.msra.mxu0 0.0
    %1766 = vmatprep.subr.mxu0 0.0
    %1767 = vmatpush2.msra.mxu0 0.0
    %1768 = vmatprep.subr.mxu0 0.0
    %1769 = vmatpush2.msra.mxu0 0.0
    %1770 = vmatprep.subr.mxu0 0.0
    %1771 = vmatpush2.msra.mxu0 0.0
    %1772 = vmatprep.subr.mxu0 0.0
    %1773 = vmatpush2.msra.mxu0 0.0
    %1774 = vmatprep.subr.mxu0 0.0
    %1775 = vmatpush2.msra.mxu0 0.0
    %1776 = vmatprep.mubr.f32.mxu0 0.0
    %1777 = vmatmul.mubr.f32.gmra.mxu0 %v1673
    %v1778 = vpop.f32.mrf.mxu0
    %v1779 = vadd.f32 %v1710, %v1778
    %v1780 = vpop.f32.mrf.mxu0
    %1781 = vmatprep.mubr.f32.mxu0 0.0
    %1782 = vmatmul.mubr.f32.gmra.mxu0 %v1674
    %v1783 = vpop.f32.mrf.mxu0
    %v1784 = vadd.f32 %v1710, %v1783
    %v1785 = vpop.f32.mrf.mxu0
    %1786 = vmatprep.mubr.f32.mxu0 0.0
    %1787 = vmatmul.mubr.f32.gmra.mxu0 %v1675
    %v1788 = vpop.f32.mrf.mxu0
    %v1789 = vadd.f32 %v1710, %v1788
    %v1790 = vpop.f32.mrf.mxu0
    %1791 = vmatprep.mubr.f32.mxu0 0.0
    %1792 = vmatmul.mubr.f32.gmra.mxu0 %v1676
    %v1793 = vpop.f32.mrf.mxu0
    %v1794 = vadd.f32 %v1710, %v1793
    %v1795 = vpop.f32.mrf.mxu0
    %1796 = vmatprep.mubr.f32.mxu0 0.0
    %1797 = vmatmul.mubr.f32.gmra.mxu0 %v1677
    %v1798 = vpop.f32.mrf.mxu0
    %v1799 = vadd.f32 %v1710, %v1798
    %v1800 = vpop.f32.mrf.mxu0
    %1801 = vmatprep.mubr.f32.mxu0 0.0
    %1802 = vmatmul.mubr.f32.gmra.mxu0 %v1678
    %v1803 = vpop.f32.mrf.mxu0
    %v1804 = vadd.f32 %v1710, %v1803
    %v1805 = vpop.f32.mrf.mxu0
    %1806 = vmatprep.mubr.f32.mxu0 0.0
    %1807 = vmatmul.mubr.f32.gmra.mxu0 %v1679
    %v1808 = vpop.f32.mrf.mxu0
    %v1809 = vadd.f32 %v1710, %v1808
    %v1810 = vpop.f32.mrf.mxu0
    %1811 = vmatprep.mubr.f32.mxu0 0.0
    %1812 = vmatmul.mubr.f32.gmra.mxu0 %v1680
    %v1813 = vpop.f32.mrf.mxu0
    %v1814 = vadd.f32 %v1710, %v1813
    %v1815 = vpop.f32.mrf.mxu0
    %1816 = vmatprep.mubr.f32.mxu0 0.0
    %1817 = vmatmul.mubr.f32.gmra.mxu0 %v1681
    %v1818 = vpop.f32.mrf.mxu0
    %v1819 = vadd.f32 %v1710, %v1818
    %v1820 = vpop.f32.mrf.mxu0
    %1821 = vmatprep.mubr.f32.mxu0 0.0
    %1822 = vmatmul.mubr.f32.gmra.mxu0 %v1682
    %v1823 = vpop.f32.mrf.mxu0
    %v1824 = vadd.f32 %v1710, %v1823
    %v1825 = vpop.f32.mrf.mxu0
    %1826 = vmatprep.mubr.f32.mxu0 0.0
    %1827 = vmatmul.mubr.f32.gmra.mxu0 %v1683
    %v1828 = vpop.f32.mrf.mxu0
    %v1829 = vadd.f32 %v1710, %v1828
    %v1830 = vpop.f32.mrf.mxu0
    %1831 = vmatprep.mubr.f32.mxu0 0.0
    %1832 = vmatmul.mubr.f32.gmra.mxu0 %v1684
    %v1833 = vpop.f32.mrf.mxu0
    %v1834 = vadd.f32 %v1710, %v1833
    %v1835 = vpop.f32.mrf.mxu0
    %1836 = vmatprep.mubr.f32.mxu0 0.0
    %1837 = vmatmul.mubr.f32.gmra.mxu0 %v1685
    %v1838 = vpop.f32.mrf.mxu0
    %v1839 = vadd.f32 %v1710, %v1838
    %v1840 = vpop.f32.mrf.mxu0
    %1841 = vmatprep.mubr.f32.mxu0 0.0
    %1842 = vmatmul.mubr.f32.gmra.mxu0 %v1686
    %v1843 = vpop.f32.mrf.mxu0
    %v1844 = vadd.f32 %v1710, %v1843
    %v1845 = vpop.f32.mrf.mxu0
    %1846 = vmatprep.mubr.f32.mxu0 0.0
    %1847 = vmatmul.mubr.f32.gmra.mxu0 %v1687
    %v1848 = vpop.f32.mrf.mxu0
    %v1849 = vadd.f32 %v1710, %v1848
    %v1850 = vpop.f32.mrf.mxu0
    %1851 = vmatprep.mubr.f32.mxu0 0.0
    %1852 = vmatmul.mubr.f32.gmra.mxu0 %v1688
    %v1853 = vpop.f32.mrf.mxu0
    %v1854 = vadd.f32 %v1710, %v1853
    %v1855 = vpop.f32.mrf.mxu0
    %1856 = vdwg.mxu0
    %v1857 = vmul.f32 %v1779, 0.5
    %v1858 = vmul.f32 %v1784, 0.5
    %v1859 = vmul.f32 %v1789, 0.5
    %v1860 = vmul.f32 %v1794, 0.5
    %v1861 = vmul.f32 %v1799, 0.5
    %v1862 = vmul.f32 %v1804, 0.5
    %v1863 = vmul.f32 %v1809, 0.5
    %v1864 = vmul.f32 %v1814, 0.5
    %v1865 = vmul.f32 %v1819, 0.5
    %v1866 = vmul.f32 %v1824, 0.5
    %v1867 = vmul.f32 %v1829, 0.5
    %v1868 = vmul.f32 %v1834, 0.5
    %v1869 = vmul.f32 %v1839, 0.5
    %v1870 = vmul.f32 %v1844, 0.5
    %v1871 = vmul.f32 %v1849, 0.5
    %v1872 = vmul.f32 %v1854, 0.5
    %v1873 = vmul.f32 %v1779, 0.70710677
    %v1874 = vmul.f32 %v1784, 0.70710677
    %v1875 = vmul.f32 %v1789, 0.70710677
    %v1876 = vmul.f32 %v1794, 0.70710677
    %v1877 = vmul.f32 %v1799, 0.70710677
    %v1878 = vmul.f32 %v1804, 0.70710677
    %v1879 = vmul.f32 %v1809, 0.70710677
    %v1880 = vmul.f32 %v1814, 0.70710677
    %v1881 = vmul.f32 %v1819, 0.70710677
    %v1882 = vmul.f32 %v1824, 0.70710677
    %v1883 = vmul.f32 %v1829, 0.70710677
    %v1884 = vmul.f32 %v1834, 0.70710677
    %v1885 = vmul.f32 %v1839, 0.70710677
    %v1886 = vmul.f32 %v1844, 0.70710677
    %v1887 = vmul.f32 %v1849, 0.70710677
    %v1888 = vmul.f32 %v1854, 0.70710677
    %v1889 = verf.f32.pop %v1873
    %v1890 = verf.f32.pop %v1874
    %v1891 = verf.f32.pop %v1875
    %v1892 = verf.f32.pop %v1876
    %v1893 = verf.f32.pop %v1877
    %v1894 = verf.f32.pop %v1878
    %v1895 = verf.f32.pop %v1879
    %v1896 = verf.f32.pop %v1880
    %v1897 = verf.f32.pop %v1881
    %v1898 = verf.f32.pop %v1882
    %v1899 = verf.f32.pop %v1883
    %v1900 = verf.f32.pop %v1884
    %v1901 = verf.f32.pop %v1885
    %v1902 = verf.f32.pop %v1886
    %v1903 = verf.f32.pop %v1887
    %v1904 = verf.f32.pop %v1888
    %v1905 = vadd.f32 %v1889, 1.0
    %v1906 = vadd.f32 %v1890, 1.0
    %v1907 = vadd.f32 %v1891, 1.0
    %v1908 = vadd.f32 %v1892, 1.0
    %v1909 = vadd.f32 %v1893, 1.0
    %v1910 = vadd.f32 %v1894, 1.0
    %v1911 = vadd.f32 %v1895, 1.0
    %v1912 = vadd.f32 %v1896, 1.0
    %v1913 = vadd.f32 %v1897, 1.0
    %v1914 = vadd.f32 %v1898, 1.0
    %v1915 = vadd.f32 %v1899, 1.0
    %v1916 = vadd.f32 %v1900, 1.0
    %v1917 = vadd.f32 %v1901, 1.0
    %v1918 = vadd.f32 %v1902, 1.0
    %v1919 = vadd.f32 %v1903, 1.0
    %v1920 = vadd.f32 %v1904, 1.0
    %v1921 = vmul.f32 %v1857, %v1905
    %v1922 = vmul.f32 %v1858, %v1906
    %v1923 = vmul.f32 %v1859, %v1907
    %v1924 = vmul.f32 %v1860, %v1908
    %v1925 = vmul.f32 %v1861, %v1909
    %v1926 = vmul.f32 %v1862, %v1910
    %v1927 = vmul.f32 %v1863, %v1911
    %v1928 = vmul.f32 %v1864, %v1912
    %v1929 = vmul.f32 %v1865, %v1913
    %v1930 = vmul.f32 %v1866, %v1914
    %v1931 = vmul.f32 %v1867, %v1915
    %v1932 = vmul.f32 %v1868, %v1916
    %v1933 = vmul.f32 %v1869, %v1917
    %v1934 = vmul.f32 %v1870, %v1918
    %v1935 = vmul.f32 %v1871, %v1919
    %v1936 = vmul.f32 %v1872, %v1920
    %v1937 = vld [vmem:[#allocation2] sm:$0xff]
    %1938 = vmatprep.subr.mxu0 0.0
    %1939 = vmatpush1.xpose.msra.mxu0 %v1936
    %1940 = vmatprep.subr.mxu0 0.0
    %1941 = vmatpush1.xpose.msra.mxu0 %v1935
    %1942 = vmatprep.subr.mxu0 0.0
    %1943 = vmatpush1.xpose.msra.mxu0 %v1934
    %1944 = vmatprep.subr.mxu0 0.0
    %1945 = vmatpush1.xpose.msra.mxu0 %v1933
    %1946 = vmatprep.subr.mxu0 0.0
    %1947 = vmatpush1.xpose.msra.mxu0 %v1932
    %1948 = vmatprep.subr.mxu0 0.0
    %1949 = vmatpush1.xpose.msra.mxu0 %v1931
    %1950 = vmatprep.subr.mxu0 0.0
    %1951 = vmatpush1.xpose.msra.mxu0 %v1930
    %1952 = vmatprep.subr.mxu0 0.0
    %1953 = vmatpush1.xpose.msra.mxu0 %v1929
    %1954 = vmatprep.subr.mxu0 0.0
    %1955 = vmatpush1.xpose.msra.mxu0 %v1928
    %1956 = vmatprep.subr.mxu0 0.0
    %1957 = vmatpush1.xpose.msra.mxu0 %v1927
    %1958 = vmatprep.subr.mxu0 0.0
    %1959 = vmatpush1.xpose.msra.mxu0 %v1926
    %1960 = vmatprep.subr.mxu0 0.0
    %1961 = vmatpush1.xpose.msra.mxu0 %v1925
    %1962 = vmatprep.subr.mxu0 0.0
    %1963 = vmatpush1.xpose.msra.mxu0 %v1924
    %1964 = vmatprep.subr.mxu0 0.0
    %1965 = vmatpush1.xpose.msra.mxu0 %v1923
    %1966 = vmatprep.subr.mxu0 0.0
    %1967 = vmatpush1.xpose.msra.mxu0 %v1922
    %1968 = vmatprep.subr.mxu0 0.0
    %1969 = vmatpush1.xpose.msra.mxu0 %v1921
    %1970 = vmatprep.subr.mxu0 0.0
    %1971 = vmatpush2.xpose.msra.mxu0 0.0
    %1972 = vmatprep.subr.mxu0 0.0
    %1973 = vmatpush2.xpose.msra.mxu0 0.0
    %1974 = vmatprep.subr.mxu0 0.0
    %1975 = vmatpush2.xpose.msra.mxu0 0.0
    %1976 = vmatprep.subr.mxu0 0.0
    %1977 = vmatpush2.xpose.msra.mxu0 0.0
    %1978 = vmatprep.subr.mxu0 0.0
    %1979 = vmatpush2.xpose.msra.mxu0 0.0
    %1980 = vmatprep.subr.mxu0 0.0
    %1981 = vmatpush2.xpose.msra.mxu0 0.0
    %1982 = vmatprep.subr.mxu0 0.0
    %1983 = vmatpush2.xpose.msra.mxu0 0.0
    %1984 = vmatprep.subr.mxu0 0.0
    %1985 = vmatpush2.xpose.msra.mxu0 0.0
    %1986 = vmatprep.subr.mxu0 0.0
    %1987 = vmatpush2.xpose.msra.mxu0 0.0
    %1988 = vmatprep.subr.mxu0 0.0
    %1989 = vmatpush2.xpose.msra.mxu0 0.0
    %1990 = vmatprep.subr.mxu0 0.0
    %1991 = vmatpush2.xpose.msra.mxu0 0.0
    %1992 = vmatprep.subr.mxu0 0.0
    %1993 = vmatpush2.xpose.msra.mxu0 0.0
    %1994 = vmatprep.subr.mxu0 0.0
    %1995 = vmatpush2.xpose.msra.mxu0 0.0
    %1996 = vmatprep.subr.mxu0 0.0
    %1997 = vmatpush2.xpose.msra.mxu0 0.0
    %1998 = vmatprep.subr.mxu0 0.0
    %1999 = vmatpush2.xpose.msra.mxu0 0.0
    %2000 = vmatprep.subr.mxu0 0.0
    %2001 = vmatpush2.xpose.msra.mxu0 0.0
    %2002 = vmatprep.mubr.f32.mxu0 0.0
    %2003 = vmatmul.mubr.f32.gmra.mxu0 %v1937
    %v2004 = vpop.f32.mrf.mxu0
    %v2005 = vadd.f32 0.0, %v2004
    %v2006 = vpop.f32.mrf.mxu0
    %2007 = vdwg.mxu0
    %2008 = vst [vmem:[%s22] sm:$0xff] %v2005
    // Predicated region
    $region122: #{deeponet1d_forward.1} parent=1 // pred_check
      _
    $region123: #{deeponet1d_forward.1} parent=1 // pred_check_branch
      %2010 = sbr.rel (0) target = $region125
    $region124: #{deeponet1d_forward.1} parent=1 // pred_region
      _
    $region125: #{deeponet1d_forward.1} parent=1 // pred_fallthru
      _
    // Predicated region
    $region126: #{deeponet1d_forward.1} parent=1 // pred_check
      _
    $region127: #{deeponet1d_forward.1} parent=1 // pred_check_branch
      %2012 = sbr.rel (0) target = $region129
    $region128: #{deeponet1d_forward.1} parent=1 // pred_region
      _
    $region129: #{deeponet1d_forward.1} parent=1 // pred_fallthru
      _
    %2013 = vsyncpa [#allocation4], 1
    %2014 = vsyncpa [#allocation6], 1
    %2015 = vsyncpa [#allocation9], 1
    %2016 = vsyncpa [#allocation12], 1

</llo_original>
